<compile_context>
chip_gen: v7x
topology: tpu7x:2x2x1
jax: 0.10.0
libtpu: 0.0.40
codegen_flags: <defaults>
</compile_context>

<pallas_src>
import math
import jax
import jax.numpy as jnp
from jax import lax
from jax.experimental import pallas as pl
from jax.experimental.pallas import tpu as pltpu

EMBED_DIM = 48
NUM_HEADS = 4
HEAD_DIM = EMBED_DIM // NUM_HEADS
MLP_SIZE = 128          # module default is 3072; kept small (constructor arg)
LN_EPS = 1e-5


def _erf(x):
    # Abramowitz & Stegun 7.1.26 rational approximation (|err| < 1.5e-7).
    a1, a2, a3, a4, a5 = 0.254829592, -0.284496736, 1.421413741, -1.453152027, 1.061405429
    p = 0.3275911
    s = jnp.where(x >= 0.0, 1.0, -1.0)
    z = jnp.abs(x)
    t = 1.0 / (1.0 + p * z)
    poly = ((((a5 * t + a4) * t + a3) * t + a2) * t + a1) * t
    return s * (1.0 - poly * jnp.exp(-z * z))


def _gelu_exact(x):
    # nn.GELU() default = exact erf GELU
    return 0.5 * x * (1.0 + _erf(x * (1.0 / math.sqrt(2.0))))


def _layer_norm(x, w, b):
    mu = jnp.mean(x, axis=-1, keepdims=True)
    var = jnp.mean((x - mu) ** 2, axis=-1, keepdims=True)   # biased variance (PyTorch LayerNorm)
    return (x - mu) * lax.rsqrt(var + LN_EPS) * w + b


def encoder_kernel(x_ref, ln1_w, ln1_b, wqkv, bqkv, wo, bo,
                   ln2_w, ln2_b, w1, b1, w2, b2, o_ref):
    S, E = x_ref.shape
    bf16 = jnp.bfloat16
    f32 = jnp.float32

    x = x_ref[...].astype(f32)                                   # (S, E)

    # ---- MultiheadSelfAttentionBlock: x = x + MHA(LN(x)) ----
    xn = _layer_norm(x, ln1_w[...], ln1_b[...])                  # (S, E) f32

    # One dense QKV projection: (S, E) @ (E, 3E) on the MXU in bf16, f32 accumulate.
    qkv = jnp.dot(xn.astype(bf16), wqkv[...],
                  preferred_element_type=f32) + bqkv[...]        # (S, 3E)
    q = qkv[:, :E]                     # already scaled by 1/sqrt(Dh) (folded into weights)
    k = qkv[:, E:2 * E]
    v = qkv[:, 2 * E:]

    # Per-head attention (scores / softmax / p@v are inherently per-head); static
    # lane slices of the dense QKV result, no reshapes or head-batched broadcasts.
    ctx_heads = []
    for h in range(NUM_HEADS):
        lo, hi = h * HEAD_DIM, (h + 1) * HEAD_DIM
        qh = q[:, lo:hi].astype(bf16)                            # (S, Dh)
        kh = k[:, lo:hi].astype(bf16)
        vh = v[:, lo:hi].astype(bf16)
        s = jnp.einsum('qd,kd->qk', qh, kh, preferred_element_type=f32)   # (S, S)
        s = s - jnp.max(s, axis=-1, keepdims=True)
        p = jnp.exp(s)
        p = p * pl.reciprocal(jnp.sum(p, axis=-1, keepdims=True), approx=True)
        ctx_heads.append(jnp.einsum('qk,kd->qd', p.astype(bf16), vh,
                                    preferred_element_type=f32))          # (S, Dh)
    ctx = jnp.concatenate(ctx_heads, axis=-1)                    # (S, E), heads on lanes

    # One dense output projection (S, E) @ (E, E); dropout = identity (eval).
    attn = jnp.dot(ctx.astype(bf16), wo[...],
                   preferred_element_type=f32) + bo[...]
    x = x + attn

    # ---- MLPBlock: x = x + W2 @ GELU(W1 @ LN(x)) ----
    xn2 = _layer_norm(x, ln2_w[...], ln2_b[...])
    h1 = _gelu_exact(jnp.dot(xn2.astype(bf16), w1[...],
                             preferred_element_type=f32) + b1[...])
    h2 = jnp.dot(h1.astype(bf16), w2[...],
                 preferred_element_type=f32) + b2[...]
    o_ref[...] = (x + h2).astype(o_ref.dtype)


def transformer_encoder_block(x, params):
    B, S, E = x.shape
    H, Dh, M = NUM_HEADS, HEAD_DIM, MLP_SIZE
    scale = 1.0 / math.sqrt(Dh)
    bf16 = jnp.bfloat16

    # Fused QKV weight (E, 3E); fold softmax scale into the Q projection (wrapper-side,
    # constant-folded by XLA).  Matmul weights go to bf16; biases/LN stay f32.
    wqkv = jnp.concatenate([params["wq"] * scale, params["wk"], params["wv"]],
                           axis=1).astype(bf16)                  # (E, 3E)
    bqkv = jnp.concatenate([params["bq"] * scale, params["bk"], params["bv"]],
                           axis=1)                               # (1, 3E) f32
    wo = params["wo"].astype(bf16)
    w1 = params["w1"].astype(bf16)
    w2 = params["w2"].astype(bf16)

    def full_spec(shape):
        # whole-array block, same block every grid step (no re-DMA across iterations)
        return pl.BlockSpec(shape, lambda b, _n=len(shape): (0,) * _n)

    in_specs = [
        pl.BlockSpec((None, S, E), lambda b: (b, 0, 0)),         # x: one batch row / step
        full_spec((1, E)), full_spec((1, E)),                    # ln1 w,b
        full_spec((E, 3 * E)), full_spec((1, 3 * E)),            # fused QKV
        full_spec((E, E)), full_spec((1, E)),                    # out proj
        full_spec((1, E)), full_spec((1, E)),                    # ln2 w,b
        full_spec((E, M)), full_spec((1, M)),                    # mlp fc1
        full_spec((M, E)), full_spec((1, E)),                    # mlp fc2
    ]
    out_spec = pl.BlockSpec((None, S, E), lambda b: (b, 0, 0))

    # Advisory cost estimate (per-batch matmul flops x B, exp counts, bytes moved).
    flops_per_b = (2 * S * E * 3 * E            # QKV
                   + 2 * S * S * E              # scores (all heads)
                   + 2 * S * S * E              # p @ v (all heads)
                   + 2 * S * E * E              # output projection
                   + 2 * 2 * S * E * M)         # MLP fc1 + fc2
    bytes_acc = (2 * B * S * E * 4                                  # x in + out
                 + (E * 3 * E + E * E + E * M + M * E) * 2          # bf16 weights
                 + (3 * E + E + M + E + 4 * E) * 4)                 # biases + LN params
    cost = pl.CostEstimate(flops=int(B * flops_per_b),
                           transcendentals=int(B * (H * S * S + S * M)),
                           bytes_accessed=int(bytes_acc))

    out = pl.pallas_call(
        encoder_kernel,
        out_shape=jax.ShapeDtypeStruct((B, S, E), x.dtype),
        grid_spec=pltpu.PrefetchScalarGridSpec(
            num_scalar_prefetch=0,
            grid=(B,),
            in_specs=in_specs,
            out_specs=out_spec,
        ),
        compiler_params=pltpu.CompilerParams(
            dimension_semantics=("parallel",)),
        cost_estimate=cost,
    )(x, params["ln1_w"], params["ln1_b"], wqkv, bqkv, wo, params["bo"],
      params["ln2_w"], params["ln2_b"], w1, params["b1"], w2, params["b2"])
    return out


def make_params(key):
    ks = jax.random.split(key, 10)
    E, M = EMBED_DIM, MLP_SIZE
    f32 = jnp.float32
    p = {
        # LayerNorms (PyTorch default init: weight=1, bias=0)
        "ln1_w": jnp.ones((1, E), f32), "ln1_b": jnp.zeros((1, E), f32),
        "ln2_w": jnp.ones((1, E), f32), "ln2_b": jnp.zeros((1, E), f32),
        # Attention projections, stored (in, out) so y = x @ W + b
        "wq": 0.05 * jax.random.normal(ks[0], (E, E), f32),
        "wk": 0.05 * jax.random.normal(ks[1], (E, E), f32),
        "wv": 0.05 * jax.random.normal(ks[2], (E, E), f32),
        "bq": 0.01 * jax.random.normal(ks[3], (1, E), f32),
        "bk": 0.01 * jax.random.normal(ks[4], (1, E), f32),
        "bv": 0.01 * jax.random.normal(ks[5], (1, E), f32),
        "wo": 0.05 * jax.random.normal(ks[6], (E, E), f32),
        "bo": jnp.zeros((1, E), f32),
        # MLP
        "w1": 0.05 * jax.random.normal(ks[7], (E, M), f32),
        "b1": 0.01 * jax.random.normal(ks[8], (1, M), f32),
        "w2": 0.05 * jax.random.normal(ks[9], (M, E), f32),
        "b2": jnp.zeros((1, E), f32),
    }
    return p


def reference(x, p):
    # pure-JAX f32 reference (exact erf GELU) for verification
    def ln(t, w, b):
        mu = t.mean(-1, keepdims=True)
        var = ((t - mu) ** 2).mean(-1, keepdims=True)
        return (t - mu) / jnp.sqrt(var + LN_EPS) * w + b

    B, S, E = x.shape
    xn = ln(x, p["ln1_w"], p["ln1_b"])
    q = xn @ p["wq"] + p["bq"]
    k = xn @ p["wk"] + p["bk"]
    v = xn @ p["wv"] + p["bv"]
    qh = q.reshape(B, S, NUM_HEADS, HEAD_DIM).transpose(0, 2, 1, 3)
    kh = k.reshape(B, S, NUM_HEADS, HEAD_DIM).transpose(0, 2, 1, 3)
    vh = v.reshape(B, S, NUM_HEADS, HEAD_DIM).transpose(0, 2, 1, 3)
    s = (qh @ kh.transpose(0, 1, 3, 2)) / math.sqrt(HEAD_DIM)
    a = jax.nn.softmax(s, axis=-1)
    ctx = (a @ vh).transpose(0, 2, 1, 3).reshape(B, S, E)
    x = x + ctx @ p["wo"] + p["bo"]
    xn2 = ln(x, p["ln2_w"], p["ln2_b"])
    h = jax.nn.gelu(xn2 @ p["w1"] + p["b1"], approximate=False)
    return x + h @ p["w2"] + p["b2"]


if __name__ == "__main__":
    key = jax.random.PRNGKey(0)
    kx, kp = jax.random.split(key)
    B, S = 2, 8
    x = jax.random.normal(kx, (B, S, EMBED_DIM), jnp.float32)
    params = make_params(kp)

    out = transformer_encoder_block(x, params)
    out = jax.block_until_ready(out)

    ref = reference(x, params)
    assert out.shape == (B, S, EMBED_DIM)
    # bf16 matmul operands (f32 accumulate) + approx reciprocal softmax -> ~1e-2 tolerance
    # vs. the pure-f32 reference.
    assert jnp.allclose(out, ref, rtol=2e-2, atol=2e-2), float(jnp.max(jnp.abs(out - ref)))
    print("KERNEL_OK")
</pallas_src>

<mosaic_0001>
module attributes {stable_mosaic.version = 11 : i64} {
  func.func @encoder_kernel(%arg0: i32, %arg1: memref<1x8x48xf32, #tpu.memory_space<vmem>>, %arg2: memref<1x48xf32, #tpu.memory_space<vmem>>, %arg3: memref<1x48xf32, #tpu.memory_space<vmem>>, %arg4: memref<48x144xbf16, #tpu.memory_space<vmem>>, %arg5: memref<1x144xf32, #tpu.memory_space<vmem>>, %arg6: memref<48x48xbf16, #tpu.memory_space<vmem>>, %arg7: memref<1x48xf32, #tpu.memory_space<vmem>>, %arg8: memref<1x48xf32, #tpu.memory_space<vmem>>, %arg9: memref<1x48xf32, #tpu.memory_space<vmem>>, %arg10: memref<48x128xbf16, #tpu.memory_space<vmem>>, %arg11: memref<1x128xf32, #tpu.memory_space<vmem>>, %arg12: memref<128x48xbf16, #tpu.memory_space<vmem>>, %arg13: memref<1x48xf32, #tpu.memory_space<vmem>>, %arg14: memref<1x8x48xf32, #tpu.memory_space<vmem>>) attributes {dimension_semantics = [#tpu.dimension_semantics<parallel>], iteration_bounds = array<i64: 2>, scalar_prefetch = 0 : i64, scratch_operands = 0 : i64, tpu.core_type = #tpu.core_type<tc>, window_params = [{transform_indices = @transform_0, window_bounds = array<i64: 1, 8, 48>}, {pipeline_mode = #tpu.pipeline_mode<synchronous>, transform_indices = @transform_1, window_bounds = array<i64: 1, 48>}, {pipeline_mode = #tpu.pipeline_mode<synchronous>, transform_indices = @transform_2, window_bounds = array<i64: 1, 48>}, {pipeline_mode = #tpu.pipeline_mode<synchronous>, transform_indices = @transform_3, window_bounds = array<i64: 48, 144>}, {pipeline_mode = #tpu.pipeline_mode<synchronous>, transform_indices = @transform_4, window_bounds = array<i64: 1, 144>}, {pipeline_mode = #tpu.pipeline_mode<synchronous>, transform_indices = @transform_5, window_bounds = array<i64: 48, 48>}, {pipeline_mode = #tpu.pipeline_mode<synchronous>, transform_indices = @transform_6, window_bounds = array<i64: 1, 48>}, {pipeline_mode = #tpu.pipeline_mode<synchronous>, transform_indices = @transform_7, window_bounds = array<i64: 1, 48>}, {pipeline_mode = #tpu.pipeline_mode<synchronous>, transform_indices = @transform_8, window_bounds = array<i64: 1, 48>}, {pipeline_mode = #tpu.pipeline_mode<synchronous>, transform_indices = @transform_9, window_bounds = array<i64: 48, 128>}, {pipeline_mode = #tpu.pipeline_mode<synchronous>, transform_indices = @transform_10, window_bounds = array<i64: 1, 128>}, {pipeline_mode = #tpu.pipeline_mode<synchronous>, transform_indices = @transform_11, window_bounds = array<i64: 128, 48>}, {pipeline_mode = #tpu.pipeline_mode<synchronous>, transform_indices = @transform_12, window_bounds = array<i64: 1, 48>}, {transform_indices = @transform_13, window_bounds = array<i64: 1, 8, 48>}]} {
    %c0 = arith.constant 0 : index
    %c0_0 = arith.constant 0 : index
    %c0_1 = arith.constant 0 : index
    %0 = vector.load %arg1[%c0, %c0_0, %c0_1] : memref<1x8x48xf32, #tpu.memory_space<vmem>>, vector<1x8x48xf32>
    %1 = vector.shape_cast %0 : vector<1x8x48xf32> to vector<8x48xf32>
    %c0_2 = arith.constant 0 : index
    %c0_3 = arith.constant 0 : index
    %2 = vector.load %arg2[%c0_2, %c0_3] : memref<1x48xf32, #tpu.memory_space<vmem>>, vector<1x48xf32>
    %c0_4 = arith.constant 0 : index
    %c0_5 = arith.constant 0 : index
    %3 = vector.load %arg3[%c0_4, %c0_5] : memref<1x48xf32, #tpu.memory_space<vmem>>, vector<1x48xf32>
    %cst = arith.constant dense<0.000000e+00> : vector<8xf32>
    %4 = vector.multi_reduction <add>, %1, %cst [1] : vector<8x48xf32> to vector<8xf32>
    %5 = vector.shape_cast %4 : vector<8xf32> to vector<8x1xf32>
    %cst_6 = arith.constant 4.800000e+01 : f32
    %6 = vector.broadcast %cst_6 : f32 to vector<8x1xf32>
    %7 = arith.divf %5, %6 : vector<8x1xf32>
    %8 = vector.broadcast %7 : vector<8x1xf32> to vector<8x48xf32>
    %9 = arith.subf %1, %8 : vector<8x48xf32>
    %10 = arith.mulf %9, %9 : vector<8x48xf32>
    %cst_7 = arith.constant dense<0.000000e+00> : vector<8xf32>
    %11 = vector.multi_reduction <add>, %10, %cst_7 [1] : vector<8x48xf32> to vector<8xf32>
    %12 = vector.shape_cast %11 : vector<8xf32> to vector<8x1xf32>
    %cst_8 = arith.constant 4.800000e+01 : f32
    %13 = vector.broadcast %cst_8 : f32 to vector<8x1xf32>
    %14 = arith.divf %12, %13 : vector<8x1xf32>
    %15 = vector.broadcast %7 : vector<8x1xf32> to vector<8x48xf32>
    %16 = arith.subf %1, %15 : vector<8x48xf32>
    %cst_9 = arith.constant 9.99999974E-6 : f32
    %17 = vector.broadcast %cst_9 : f32 to vector<8x1xf32>
    %18 = arith.addf %14, %17 : vector<8x1xf32>
    %19 = math.rsqrt %18 : vector<8x1xf32>
    %20 = vector.broadcast %19 : vector<8x1xf32> to vector<8x48xf32>
    %21 = arith.mulf %16, %20 : vector<8x48xf32>
    %22 = vector.broadcast %2 : vector<1x48xf32> to vector<8x48xf32>
    %23 = arith.mulf %21, %22 : vector<8x48xf32>
    %24 = vector.broadcast %3 : vector<1x48xf32> to vector<8x48xf32>
    %25 = arith.addf %23, %24 : vector<8x48xf32>
    %26 = arith.truncf %25 : vector<8x48xf32> to vector<8x48xbf16>
    %c0_10 = arith.constant 0 : index
    %c0_11 = arith.constant 0 : index
    %27 = vector.load %arg4[%c0_10, %c0_11] : memref<48x144xbf16, #tpu.memory_space<vmem>>, vector<48x144xbf16>
    %cst_12 = arith.constant dense<0.000000e+00> : vector<8x144xf32>
    %28 = tpu.matmul %26, %27, %cst_12 {dimension_numbers = #tpu.dot_dimension_numbers<[1], [0], [0], [1], [0, 0, 1, 1], [], []>} : vector<8x48xbf16>, vector<48x144xbf16>, vector<8x144xf32> -> vector<8x144xf32>
    %c0_13 = arith.constant 0 : index
    %c0_14 = arith.constant 0 : index
    %29 = vector.load %arg5[%c0_13, %c0_14] : memref<1x144xf32, #tpu.memory_space<vmem>>, vector<1x144xf32>
    %30 = vector.broadcast %29 : vector<1x144xf32> to vector<8x144xf32>
    %31 = arith.addf %28, %30 : vector<8x144xf32>
    %32 = vector.extract_strided_slice %31 {offsets = [0, 0], sizes = [8, 48], strides = [1, 1]} : vector<8x144xf32> to vector<8x48xf32>
    %33 = vector.extract_strided_slice %31 {offsets = [0, 48], sizes = [8, 48], strides = [1, 1]} : vector<8x144xf32> to vector<8x48xf32>
    %34 = vector.extract_strided_slice %31 {offsets = [0, 96], sizes = [8, 48], strides = [1, 1]} : vector<8x144xf32> to vector<8x48xf32>
    %35 = vector.extract_strided_slice %32 {offsets = [0, 0], sizes = [8, 12], strides = [1, 1]} : vector<8x48xf32> to vector<8x12xf32>
    %36 = arith.truncf %35 : vector<8x12xf32> to vector<8x12xbf16>
    %37 = vector.extract_strided_slice %33 {offsets = [0, 0], sizes = [8, 12], strides = [1, 1]} : vector<8x48xf32> to vector<8x12xf32>
    %38 = arith.truncf %37 : vector<8x12xf32> to vector<8x12xbf16>
    %39 = vector.extract_strided_slice %34 {offsets = [0, 0], sizes = [8, 12], strides = [1, 1]} : vector<8x48xf32> to vector<8x12xf32>
    %40 = arith.truncf %39 : vector<8x12xf32> to vector<8x12xbf16>
    "tpu.trace_start"() <{level = 10 : i32, message = "qd,kd->qk"}> : () -> ()
    %cst_15 = arith.constant dense<0.000000e+00> : vector<8x8xf32>
    %41 = tpu.matmul %36, %38, %cst_15 {dimension_numbers = #tpu.dot_dimension_numbers<[1], [1], [0], [0], [0, 0, 1, 0], [], []>} : vector<8x12xbf16>, vector<8x12xbf16>, vector<8x8xf32> -> vector<8x8xf32>
    "tpu.trace_stop"() : () -> ()
    %cst_16 = arith.constant dense<0xFF800000> : vector<8xf32>
    %42 = vector.multi_reduction <maximumf>, %41, %cst_16 [1] : vector<8x8xf32> to vector<8xf32>
    %43 = vector.shape_cast %42 : vector<8xf32> to vector<8x1xf32>
    %44 = vector.broadcast %43 : vector<8x1xf32> to vector<8x8xf32>
    %45 = arith.subf %41, %44 : vector<8x8xf32>
    %46 = math.exp %45 : vector<8x8xf32>
    %cst_17 = arith.constant dense<0.000000e+00> : vector<8xf32>
    %47 = vector.multi_reduction <add>, %46, %cst_17 [1] : vector<8x8xf32> to vector<8xf32>
    %48 = vector.shape_cast %47 : vector<8xf32> to vector<8x1xf32>
    %49 = tpu.reciprocal %48 {approx = true} : vector<8x1xf32> -> vector<8x1xf32>
    %50 = vector.broadcast %49 : vector<8x1xf32> to vector<8x8xf32>
    %51 = arith.mulf %46, %50 : vector<8x8xf32>
    %52 = arith.truncf %51 : vector<8x8xf32> to vector<8x8xbf16>
    "tpu.trace_start"() <{level = 10 : i32, message = "qk,kd->qd"}> : () -> ()
    %cst_18 = arith.constant dense<0.000000e+00> : vector<8x12xf32>
    %53 = tpu.matmul %52, %40, %cst_18 {dimension_numbers = #tpu.dot_dimension_numbers<[1], [0], [0], [1], [0, 0, 1, 1], [], []>} : vector<8x8xbf16>, vector<8x12xbf16>, vector<8x12xf32> -> vector<8x12xf32>
    "tpu.trace_stop"() : () -> ()
    %54 = vector.extract_strided_slice %32 {offsets = [0, 12], sizes = [8, 12], strides = [1, 1]} : vector<8x48xf32> to vector<8x12xf32>
    %55 = arith.truncf %54 : vector<8x12xf32> to vector<8x12xbf16>
    %56 = vector.extract_strided_slice %33 {offsets = [0, 12], sizes = [8, 12], strides = [1, 1]} : vector<8x48xf32> to vector<8x12xf32>
    %57 = arith.truncf %56 : vector<8x12xf32> to vector<8x12xbf16>
    %58 = vector.extract_strided_slice %34 {offsets = [0, 12], sizes = [8, 12], strides = [1, 1]} : vector<8x48xf32> to vector<8x12xf32>
    %59 = arith.truncf %58 : vector<8x12xf32> to vector<8x12xbf16>
    "tpu.trace_start"() <{level = 10 : i32, message = "qd,kd->qk"}> : () -> ()
    %cst_19 = arith.constant dense<0.000000e+00> : vector<8x8xf32>
    %60 = tpu.matmul %55, %57, %cst_19 {dimension_numbers = #tpu.dot_dimension_numbers<[1], [1], [0], [0], [0, 0, 1, 0], [], []>} : vector<8x12xbf16>, vector<8x12xbf16>, vector<8x8xf32> -> vector<8x8xf32>
    "tpu.trace_stop"() : () -> ()
    %cst_20 = arith.constant dense<0xFF800000> : vector<8xf32>
    %61 = vector.multi_reduction <maximumf>, %60, %cst_20 [1] : vector<8x8xf32> to vector<8xf32>
    %62 = vector.shape_cast %61 : vector<8xf32> to vector<8x1xf32>
    %63 = vector.broadcast %62 : vector<8x1xf32> to vector<8x8xf32>
    %64 = arith.subf %60, %63 : vector<8x8xf32>
    %65 = math.exp %64 : vector<8x8xf32>
    %cst_21 = arith.constant dense<0.000000e+00> : vector<8xf32>
    %66 = vector.multi_reduction <add>, %65, %cst_21 [1] : vector<8x8xf32> to vector<8xf32>
    %67 = vector.shape_cast %66 : vector<8xf32> to vector<8x1xf32>
    %68 = tpu.reciprocal %67 {approx = true} : vector<8x1xf32> -> vector<8x1xf32>
    %69 = vector.broadcast %68 : vector<8x1xf32> to vector<8x8xf32>
    %70 = arith.mulf %65, %69 : vector<8x8xf32>
    %71 = arith.truncf %70 : vector<8x8xf32> to vector<8x8xbf16>
    "tpu.trace_start"() <{level = 10 : i32, message = "qk,kd->qd"}> : () -> ()
    %cst_22 = arith.constant dense<0.000000e+00> : vector<8x12xf32>
    %72 = tpu.matmul %71, %59, %cst_22 {dimension_numbers = #tpu.dot_dimension_numbers<[1], [0], [0], [1], [0, 0, 1, 1], [], []>} : vector<8x8xbf16>, vector<8x12xbf16>, vector<8x12xf32> -> vector<8x12xf32>
    "tpu.trace_stop"() : () -> ()
    %73 = vector.extract_strided_slice %32 {offsets = [0, 24], sizes = [8, 12], strides = [1, 1]} : vector<8x48xf32> to vector<8x12xf32>
    %74 = arith.truncf %73 : vector<8x12xf32> to vector<8x12xbf16>
    %75 = vector.extract_strided_slice %33 {offsets = [0, 24], sizes = [8, 12], strides = [1, 1]} : vector<8x48xf32> to vector<8x12xf32>
    %76 = arith.truncf %75 : vector<8x12xf32> to vector<8x12xbf16>
    %77 = vector.extract_strided_slice %34 {offsets = [0, 24], sizes = [8, 12], strides = [1, 1]} : vector<8x48xf32> to vector<8x12xf32>
    %78 = arith.truncf %77 : vector<8x12xf32> to vector<8x12xbf16>
    "tpu.trace_start"() <{level = 10 : i32, message = "qd,kd->qk"}> : () -> ()
    %cst_23 = arith.constant dense<0.000000e+00> : vector<8x8xf32>
    %79 = tpu.matmul %74, %76, %cst_23 {dimension_numbers = #tpu.dot_dimension_numbers<[1], [1], [0], [0], [0, 0, 1, 0], [], []>} : vector<8x12xbf16>, vector<8x12xbf16>, vector<8x8xf32> -> vector<8x8xf32>
    "tpu.trace_stop"() : () -> ()
    %cst_24 = arith.constant dense<0xFF800000> : vector<8xf32>
    %80 = vector.multi_reduction <maximumf>, %79, %cst_24 [1] : vector<8x8xf32> to vector<8xf32>
    %81 = vector.shape_cast %80 : vector<8xf32> to vector<8x1xf32>
    %82 = vector.broadcast %81 : vector<8x1xf32> to vector<8x8xf32>
    %83 = arith.subf %79, %82 : vector<8x8xf32>
    %84 = math.exp %83 : vector<8x8xf32>
    %cst_25 = arith.constant dense<0.000000e+00> : vector<8xf32>
    %85 = vector.multi_reduction <add>, %84, %cst_25 [1] : vector<8x8xf32> to vector<8xf32>
    %86 = vector.shape_cast %85 : vector<8xf32> to vector<8x1xf32>
    %87 = tpu.reciprocal %86 {approx = true} : vector<8x1xf32> -> vector<8x1xf32>
    %88 = vector.broadcast %87 : vector<8x1xf32> to vector<8x8xf32>
    %89 = arith.mulf %84, %88 : vector<8x8xf32>
    %90 = arith.truncf %89 : vector<8x8xf32> to vector<8x8xbf16>
    "tpu.trace_start"() <{level = 10 : i32, message = "qk,kd->qd"}> : () -> ()
    %cst_26 = arith.constant dense<0.000000e+00> : vector<8x12xf32>
    %91 = tpu.matmul %90, %78, %cst_26 {dimension_numbers = #tpu.dot_dimension_numbers<[1], [0], [0], [1], [0, 0, 1, 1], [], []>} : vector<8x8xbf16>, vector<8x12xbf16>, vector<8x12xf32> -> vector<8x12xf32>
    "tpu.trace_stop"() : () -> ()
    %92 = vector.extract_strided_slice %32 {offsets = [0, 36], sizes = [8, 12], strides = [1, 1]} : vector<8x48xf32> to vector<8x12xf32>
    %93 = arith.truncf %92 : vector<8x12xf32> to vector<8x12xbf16>
    %94 = vector.extract_strided_slice %33 {offsets = [0, 36], sizes = [8, 12], strides = [1, 1]} : vector<8x48xf32> to vector<8x12xf32>
    %95 = arith.truncf %94 : vector<8x12xf32> to vector<8x12xbf16>
    %96 = vector.extract_strided_slice %34 {offsets = [0, 36], sizes = [8, 12], strides = [1, 1]} : vector<8x48xf32> to vector<8x12xf32>
    %97 = arith.truncf %96 : vector<8x12xf32> to vector<8x12xbf16>
    "tpu.trace_start"() <{level = 10 : i32, message = "qd,kd->qk"}> : () -> ()
    %cst_27 = arith.constant dense<0.000000e+00> : vector<8x8xf32>
    %98 = tpu.matmul %93, %95, %cst_27 {dimension_numbers = #tpu.dot_dimension_numbers<[1], [1], [0], [0], [0, 0, 1, 0], [], []>} : vector<8x12xbf16>, vector<8x12xbf16>, vector<8x8xf32> -> vector<8x8xf32>
    "tpu.trace_stop"() : () -> ()
    %cst_28 = arith.constant dense<0xFF800000> : vector<8xf32>
    %99 = vector.multi_reduction <maximumf>, %98, %cst_28 [1] : vector<8x8xf32> to vector<8xf32>
    %100 = vector.shape_cast %99 : vector<8xf32> to vector<8x1xf32>
    %101 = vector.broadcast %100 : vector<8x1xf32> to vector<8x8xf32>
    %102 = arith.subf %98, %101 : vector<8x8xf32>
    %103 = math.exp %102 : vector<8x8xf32>
    %cst_29 = arith.constant dense<0.000000e+00> : vector<8xf32>
    %104 = vector.multi_reduction <add>, %103, %cst_29 [1] : vector<8x8xf32> to vector<8xf32>
    %105 = vector.shape_cast %104 : vector<8xf32> to vector<8x1xf32>
    %106 = tpu.reciprocal %105 {approx = true} : vector<8x1xf32> -> vector<8x1xf32>
    %107 = vector.broadcast %106 : vector<8x1xf32> to vector<8x8xf32>
    %108 = arith.mulf %103, %107 : vector<8x8xf32>
    %109 = arith.truncf %108 : vector<8x8xf32> to vector<8x8xbf16>
    "tpu.trace_start"() <{level = 10 : i32, message = "qk,kd->qd"}> : () -> ()
    %cst_30 = arith.constant dense<0.000000e+00> : vector<8x12xf32>
    %110 = tpu.matmul %109, %97, %cst_30 {dimension_numbers = #tpu.dot_dimension_numbers<[1], [0], [0], [1], [0, 0, 1, 1], [], []>} : vector<8x8xbf16>, vector<8x12xbf16>, vector<8x12xf32> -> vector<8x12xf32>
    "tpu.trace_stop"() : () -> ()
    %111 = tpu.concatenate %53, %72, %91, %110 in 1 : vector<8x12xf32>, vector<8x12xf32>, vector<8x12xf32>, vector<8x12xf32> -> vector<8x48xf32>
    %112 = arith.truncf %111 : vector<8x48xf32> to vector<8x48xbf16>
    %c0_31 = arith.constant 0 : index
    %c0_32 = arith.constant 0 : index
    %113 = vector.load %arg6[%c0_31, %c0_32] : memref<48x48xbf16, #tpu.memory_space<vmem>>, vector<48x48xbf16>
    %cst_33 = arith.constant dense<0.000000e+00> : vector<8x48xf32>
    %114 = tpu.matmul %112, %113, %cst_33 {dimension_numbers = #tpu.dot_dimension_numbers<[1], [0], [0], [1], [0, 0, 1, 1], [], []>} : vector<8x48xbf16>, vector<48x48xbf16>, vector<8x48xf32> -> vector<8x48xf32>
    %c0_34 = arith.constant 0 : index
    %c0_35 = arith.constant 0 : index
    %115 = vector.load %arg7[%c0_34, %c0_35] : memref<1x48xf32, #tpu.memory_space<vmem>>, vector<1x48xf32>
    %116 = vector.broadcast %115 : vector<1x48xf32> to vector<8x48xf32>
    %117 = arith.addf %114, %116 : vector<8x48xf32>
    %118 = arith.addf %1, %117 : vector<8x48xf32>
    %c0_36 = arith.constant 0 : index
    %c0_37 = arith.constant 0 : index
    %119 = vector.load %arg8[%c0_36, %c0_37] : memref<1x48xf32, #tpu.memory_space<vmem>>, vector<1x48xf32>
    %c0_38 = arith.constant 0 : index
    %c0_39 = arith.constant 0 : index
    %120 = vector.load %arg9[%c0_38, %c0_39] : memref<1x48xf32, #tpu.memory_space<vmem>>, vector<1x48xf32>
    %cst_40 = arith.constant dense<0.000000e+00> : vector<8xf32>
    %121 = vector.multi_reduction <add>, %118, %cst_40 [1] : vector<8x48xf32> to vector<8xf32>
    %122 = vector.shape_cast %121 : vector<8xf32> to vector<8x1xf32>
    %cst_41 = arith.constant 4.800000e+01 : f32
    %123 = vector.broadcast %cst_41 : f32 to vector<8x1xf32>
    %124 = arith.divf %122, %123 : vector<8x1xf32>
    %125 = vector.broadcast %124 : vector<8x1xf32> to vector<8x48xf32>
    %126 = arith.subf %118, %125 : vector<8x48xf32>
    %127 = arith.mulf %126, %126 : vector<8x48xf32>
    %cst_42 = arith.constant dense<0.000000e+00> : vector<8xf32>
    %128 = vector.multi_reduction <add>, %127, %cst_42 [1] : vector<8x48xf32> to vector<8xf32>
    %129 = vector.shape_cast %128 : vector<8xf32> to vector<8x1xf32>
    %cst_43 = arith.constant 4.800000e+01 : f32
    %130 = vector.broadcast %cst_43 : f32 to vector<8x1xf32>
    %131 = arith.divf %129, %130 : vector<8x1xf32>
    %132 = vector.broadcast %124 : vector<8x1xf32> to vector<8x48xf32>
    %133 = arith.subf %118, %132 : vector<8x48xf32>
    %cst_44 = arith.constant 9.99999974E-6 : f32
    %134 = vector.broadcast %cst_44 : f32 to vector<8x1xf32>
    %135 = arith.addf %131, %134 : vector<8x1xf32>
    %136 = math.rsqrt %135 : vector<8x1xf32>
    %137 = vector.broadcast %136 : vector<8x1xf32> to vector<8x48xf32>
    %138 = arith.mulf %133, %137 : vector<8x48xf32>
    %139 = vector.broadcast %119 : vector<1x48xf32> to vector<8x48xf32>
    %140 = arith.mulf %138, %139 : vector<8x48xf32>
    %141 = vector.broadcast %120 : vector<1x48xf32> to vector<8x48xf32>
    %142 = arith.addf %140, %141 : vector<8x48xf32>
    %143 = arith.truncf %142 : vector<8x48xf32> to vector<8x48xbf16>
    %c0_45 = arith.constant 0 : index
    %c0_46 = arith.constant 0 : index
    %144 = vector.load %arg10[%c0_45, %c0_46] : memref<48x128xbf16, #tpu.memory_space<vmem>>, vector<48x128xbf16>
    %cst_47 = arith.constant dense<0.000000e+00> : vector<8x128xf32>
    %145 = tpu.matmul %143, %144, %cst_47 {dimension_numbers = #tpu.dot_dimension_numbers<[1], [0], [0], [1], [0, 0, 1, 1], [], []>} : vector<8x48xbf16>, vector<48x128xbf16>, vector<8x128xf32> -> vector<8x128xf32>
    %c0_48 = arith.constant 0 : index
    %c0_49 = arith.constant 0 : index
    %146 = vector.load %arg11[%c0_48, %c0_49] : memref<1x128xf32, #tpu.memory_space<vmem>>, vector<1x128xf32>
    %147 = vector.broadcast %146 : vector<1x128xf32> to vector<8x128xf32>
    %148 = arith.addf %145, %147 : vector<8x128xf32>
    %cst_50 = arith.constant 5.000000e-01 : f32
    %149 = vector.broadcast %cst_50 : f32 to vector<8x128xf32>
    %150 = arith.mulf %149, %148 : vector<8x128xf32>
    %cst_51 = arith.constant 0.707106769 : f32
    %151 = vector.broadcast %cst_51 : f32 to vector<8x128xf32>
    %152 = arith.mulf %148, %151 : vector<8x128xf32>
    %cst_52 = arith.constant 0.000000e+00 : f32
    %153 = vector.broadcast %cst_52 : f32 to vector<8x128xf32>
    %154 = arith.cmpf oge, %152, %153 : vector<8x128xf32>
    %cst_53 = arith.constant 1.000000e+00 : f32
    %cst_54 = arith.constant -1.000000e+00 : f32
    %155 = vector.broadcast %cst_53 : f32 to vector<8x128xf32>
    %156 = vector.broadcast %cst_54 : f32 to vector<8x128xf32>
    %157 = arith.select %154, %155, %156 : vector<8x128xi1>, vector<8x128xf32>
    %158 = math.absf %152 : vector<8x128xf32>
    %cst_55 = arith.constant 0.327591091 : f32
    %159 = vector.broadcast %cst_55 : f32 to vector<8x128xf32>
    %160 = arith.mulf %159, %158 : vector<8x128xf32>
    %cst_56 = arith.constant 1.000000e+00 : f32
    %161 = vector.broadcast %cst_56 : f32 to vector<8x128xf32>
    %162 = arith.addf %161, %160 : vector<8x128xf32>
    %cst_57 = arith.constant 1.000000e+00 : f32
    %163 = vector.broadcast %cst_57 : f32 to vector<8x128xf32>
    %164 = arith.divf %163, %162 : vector<8x128xf32>
    %cst_58 = arith.constant 1.06140542 : f32
    %165 = vector.broadcast %cst_58 : f32 to vector<8x128xf32>
    %166 = arith.mulf %165, %164 : vector<8x128xf32>
    %cst_59 = arith.constant -1.45315206 : f32
    %167 = vector.broadcast %cst_59 : f32 to vector<8x128xf32>
    %168 = arith.addf %166, %167 : vector<8x128xf32>
    %169 = arith.mulf %168, %164 : vector<8x128xf32>
    %cst_60 = arith.constant 1.42141378 : f32
    %170 = vector.broadcast %cst_60 : f32 to vector<8x128xf32>
    %171 = arith.addf %169, %170 : vector<8x128xf32>
    %172 = arith.mulf %171, %164 : vector<8x128xf32>
    %cst_61 = arith.constant -0.284496725 : f32
    %173 = vector.broadcast %cst_61 : f32 to vector<8x128xf32>
    %174 = arith.addf %172, %173 : vector<8x128xf32>
    %175 = arith.mulf %174, %164 : vector<8x128xf32>
    %cst_62 = arith.constant 0.254829586 : f32
    %176 = vector.broadcast %cst_62 : f32 to vector<8x128xf32>
    %177 = arith.addf %175, %176 : vector<8x128xf32>
    %178 = arith.mulf %177, %164 : vector<8x128xf32>
    %cst_63 = arith.constant 0.000000e+00 : f32
    %179 = vector.broadcast %cst_63 : f32 to vector<8x128xf32>
    %180 = arith.subf %179, %158 : vector<8x128xf32>
    %181 = arith.mulf %180, %158 : vector<8x128xf32>
    %182 = math.exp %181 : vector<8x128xf32>
    %183 = arith.mulf %178, %182 : vector<8x128xf32>
    %cst_64 = arith.constant 1.000000e+00 : f32
    %184 = vector.broadcast %cst_64 : f32 to vector<8x128xf32>
    %185 = arith.subf %184, %183 : vector<8x128xf32>
    %186 = arith.mulf %157, %185 : vector<8x128xf32>
    %cst_65 = arith.constant 1.000000e+00 : f32
    %187 = vector.broadcast %cst_65 : f32 to vector<8x128xf32>
    %188 = arith.addf %187, %186 : vector<8x128xf32>
    %189 = arith.mulf %150, %188 : vector<8x128xf32>
    %190 = arith.truncf %189 : vector<8x128xf32> to vector<8x128xbf16>
    %c0_66 = arith.constant 0 : index
    %c0_67 = arith.constant 0 : index
    %191 = vector.load %arg12[%c0_66, %c0_67] : memref<128x48xbf16, #tpu.memory_space<vmem>>, vector<128x48xbf16>
    %cst_68 = arith.constant dense<0.000000e+00> : vector<8x48xf32>
    %192 = tpu.matmul %190, %191, %cst_68 {dimension_numbers = #tpu.dot_dimension_numbers<[1], [0], [0], [1], [0, 0, 1, 1], [], []>} : vector<8x128xbf16>, vector<128x48xbf16>, vector<8x48xf32> -> vector<8x48xf32>
    %c0_69 = arith.constant 0 : index
    %c0_70 = arith.constant 0 : index
    %193 = vector.load %arg13[%c0_69, %c0_70] : memref<1x48xf32, #tpu.memory_space<vmem>>, vector<1x48xf32>
    %194 = vector.broadcast %193 : vector<1x48xf32> to vector<8x48xf32>
    %195 = arith.addf %192, %194 : vector<8x48xf32>
    %196 = arith.addf %118, %195 : vector<8x48xf32>
    %c0_71 = arith.constant 0 : index
    %c0_72 = arith.constant 0 : index
    %c0_73 = arith.constant 0 : index
    %197 = vector.load %arg14[%c0_71, %c0_72, %c0_73] : memref<1x8x48xf32, #tpu.memory_space<vmem>>, vector<1x8x48xf32>
    %198 = vector.shape_cast %197 : vector<1x8x48xf32> to vector<8x48xf32>
    %199 = vector.shape_cast %196 : vector<8x48xf32> to vector<1x8x48xf32>
    tpu.vector_store %arg14[%c0_71, %c0_72, %c0_73], %199 {strides = array<i32>} : memref<1x8x48xf32, #tpu.memory_space<vmem>>, vector<1x8x48xf32>,
    return
  }
  func.func @transform_0(%arg0: i32) -> (i32, i32, i32) {
    %c0_i32 = arith.constant 0 : i32
    %c0_i32_0 = arith.constant 0 : i32
    %c0_i32_1 = arith.constant 0 : i32
    return %arg0, %c0_i32, %c0_i32_0 : i32, i32, i32
  }
  func.func @transform_1(%arg0: i32) -> (i32, i32) {
    %c0_i32 = arith.constant 0 : i32
    %c0_i32_0 = arith.constant 0 : i32
    %c0_i32_1 = arith.constant 0 : i32
    return %c0_i32, %c0_i32_0 : i32, i32
  }
  func.func @transform_2(%arg0: i32) -> (i32, i32) {
    %c0_i32 = arith.constant 0 : i32
    %c0_i32_0 = arith.constant 0 : i32
    %c0_i32_1 = arith.constant 0 : i32
    return %c0_i32, %c0_i32_0 : i32, i32
  }
  func.func @transform_3(%arg0: i32) -> (i32, i32) {
    %c0_i32 = arith.constant 0 : i32
    %c0_i32_0 = arith.constant 0 : i32
    %c0_i32_1 = arith.constant 0 : i32
    return %c0_i32, %c0_i32_0 : i32, i32
  }
  func.func @transform_4(%arg0: i32) -> (i32, i32) {
    %c0_i32 = arith.constant 0 : i32
    %c0_i32_0 = arith.constant 0 : i32
    %c0_i32_1 = arith.constant 0 : i32
    return %c0_i32, %c0_i32_0 : i32, i32
  }
  func.func @transform_5(%arg0: i32) -> (i32, i32) {
    %c0_i32 = arith.constant 0 : i32
    %c0_i32_0 = arith.constant 0 : i32
    %c0_i32_1 = arith.constant 0 : i32
    return %c0_i32, %c0_i32_0 : i32, i32
  }
  func.func @transform_6(%arg0: i32) -> (i32, i32) {
    %c0_i32 = arith.constant 0 : i32
    %c0_i32_0 = arith.constant 0 : i32
    %c0_i32_1 = arith.constant 0 : i32
    return %c0_i32, %c0_i32_0 : i32, i32
  }
  func.func @transform_7(%arg0: i32) -> (i32, i32) {
    %c0_i32 = arith.constant 0 : i32
    %c0_i32_0 = arith.constant 0 : i32
    %c0_i32_1 = arith.constant 0 : i32
    return %c0_i32, %c0_i32_0 : i32, i32
  }
  func.func @transform_8(%arg0: i32) -> (i32, i32) {
    %c0_i32 = arith.constant 0 : i32
    %c0_i32_0 = arith.constant 0 : i32
    %c0_i32_1 = arith.constant 0 : i32
    return %c0_i32, %c0_i32_0 : i32, i32
  }
  func.func @transform_9(%arg0: i32) -> (i32, i32) {
    %c0_i32 = arith.constant 0 : i32
    %c0_i32_0 = arith.constant 0 : i32
    %c0_i32_1 = arith.constant 0 : i32
    return %c0_i32, %c0_i32_0 : i32, i32
  }
  func.func @transform_10(%arg0: i32) -> (i32, i32) {
    %c0_i32 = arith.constant 0 : i32
    %c0_i32_0 = arith.constant 0 : i32
    %c0_i32_1 = arith.constant 0 : i32
    return %c0_i32, %c0_i32_0 : i32, i32
  }
  func.func @transform_11(%arg0: i32) -> (i32, i32) {
    %c0_i32 = arith.constant 0 : i32
    %c0_i32_0 = arith.constant 0 : i32
    %c0_i32_1 = arith.constant 0 : i32
    return %c0_i32, %c0_i32_0 : i32, i32
  }
  func.func @transform_12(%arg0: i32) -> (i32, i32) {
    %c0_i32 = arith.constant 0 : i32
    %c0_i32_0 = arith.constant 0 : i32
    %c0_i32_1 = arith.constant 0 : i32
    return %c0_i32, %c0_i32_0 : i32, i32
  }
  func.func @transform_13(%arg0: i32) -> (i32, i32, i32) {
    %c0_i32 = arith.constant 0 : i32
    %c0_i32_0 = arith.constant 0 : i32
    %c0_i32_1 = arith.constant 0 : i32
    return %arg0, %c0_i32, %c0_i32_0 : i32, i32, i32
  }
}

</mosaic_0001>

<llo_original>
// kernel: tpu_custom_call.1
$region0: #{tpu_custom_call.1}
  #allocation0 [shape = 'u32[]', space=smem, size = 0x4, offset = 0x4, fixed_abs, tag = 'smem constant byte address 0x4 - core index']
  #allocation1 [shape = 'u32[144,128]{1,0:T(1,128)}', space=vmem, size = 0x12000, scoped, tag = 'internal scratch']
  %s0 = inlined_call_operand.hbm [shape: f32[2,8,48], index: 0, kind: input, shape index: {}]
  %s1 = inlined_call_operand.vmem [shape: f32[1,48], index: 1, kind: input, shape index: {}]
  %s2 = inlined_call_operand.hbm [shape: f32[1,48], index: 2, kind: input, shape index: {}]
  %s3 = inlined_call_operand.vmem [shape: bf16[48,144], index: 3, kind: input, shape index: {}]
  %s4 = inlined_call_operand.vmem [shape: f32[1,144], index: 4, kind: input, shape index: {}]
  %s5 = inlined_call_operand.vmem [shape: bf16[48,48], index: 5, kind: input, shape index: {}]
  %s6 = inlined_call_operand.vmem [shape: f32[1,48], index: 6, kind: input, shape index: {}]
  %s7 = inlined_call_operand.vmem [shape: f32[1,48], index: 7, kind: input, shape index: {}]
  %s8 = inlined_call_operand.vmem [shape: f32[1,48], index: 8, kind: input, shape index: {}]
  %s9 = inlined_call_operand.vmem [shape: bf16[48,128], index: 9, kind: input, shape index: {}]
  %s10 = inlined_call_operand.vmem [shape: f32[1,128], index: 10, kind: input, shape index: {}]
  %s11 = inlined_call_operand.vmem [shape: bf16[128,48], index: 11, kind: input, shape index: {}]
  %s12 = inlined_call_operand.vmem [shape: f32[1,48], index: 12, kind: input, shape index: {}]
  %s13 = inlined_call_operand.hbm [shape: f32[2,8,48], index: 13, kind: output, shape index: {}]
  %s14 = sld [smem:[#allocation0]]
  $region93: #{tpu_custom_call.1} parent=0
    _
  %s16 = ssub.s32 1, %s14
  %s17 = scalar_select 0, %s16, %s14
  $region1: #{tpu_custom_call.1} parent=0
    #allocation2 [shape = 'u8[8192]{0}', space=vmem, size = 0x2000, scoped, tag = 'input window, operand 0']
    #allocation3 [shape = 's32[2]{0}', space=sflag, size = 0x8, scoped, tag = 'scoped memory for tpu_custom_call.1']
    #allocation4 [shape = 's32[2]{0}', space=sflag, size = 0x8, scoped, tag = 'scoped memory for tpu_custom_call.1']
    #allocation5 [shape = 'u8[512]{0}', space=vmem, size = 0x400, scoped, tag = 'input window, operand 2, single buffered']
    #allocation6 [shape = 's32[1]{0}', space=sflag, size = 0x4, scoped, tag = 'scoped memory for tpu_custom_call.1']
    #allocation7 [shape = 'u8[8192]{0}', space=vmem, size = 0x2000, scoped, tag = 'output window, operand 0']
    %18 = vsyncpa [#allocation3], 0
    %s19 = scalar_lea.sflag [#allocation3], 1
    %20 = vsyncpa %s19, 0
    %21 = vsyncpa [#allocation6], 0
    %22 = vsyncpa [#allocation4], 0
    %s23 = scalar_lea.sflag [#allocation4], 1
    %24 = vsyncpa %s23, 0
    loop: start=0, step=1, limit=4
    $region2: #{tpu_custom_call.1} parent=1 // loop_pre_header
      _
    $region3: #{tpu_custom_call.1} parent=1 // loop_header
      %s26 = sphi 0, %s30
      %p27 = scmp.ge.s32.totalorder %s26, 4
      %s36 = sphi 0, %s38
      %s39 = sphi 0, %s36
      %s40 = sphi 0, %s39
      %s56 = sphi 0, %s40
      %s60 = sphi 0, %s60
      %s62 = sphi 0, %s60
      %s63 = sphi 0, %s62
      %s77 = sphi 0, %s63
      %s81 = sphi 0, %s81
      %s83 = sphi 0, %s81
      %s84 = sphi 0, %s83
      %s98 = sphi 0, %s84
      %s102 = sphi 0, %s102
      %s104 = sphi 0, %s102
      %s105 = sphi 0, %s104
      %s119 = sphi 0, %s105
      %s123 = sphi 0, %s123
      %s125 = sphi 0, %s123
      %s126 = sphi 0, %s125
      %s140 = sphi 0, %s126
      %s144 = sphi 0, %s144
      %s146 = sphi 0, %s144
      %s147 = sphi 0, %s146
      %s161 = sphi 0, %s147
      %s165 = sphi 0, %s165
      %s167 = sphi 0, %s165
      %s168 = sphi 0, %s167
      %s182 = sphi 0, %s168
      %s186 = sphi 0, %s186
      %s188 = sphi 0, %s186
      %s189 = sphi 0, %s188
      %s203 = sphi 0, %s189
      %s207 = sphi 0, %s207
      %s209 = sphi 0, %s207
      %s210 = sphi 0, %s209
      %s224 = sphi 0, %s210
      %s228 = sphi 0, %s228
      %s230 = sphi 0, %s228
      %s231 = sphi 0, %s230
      %s245 = sphi 0, %s231
      %s249 = sphi 0, %s249
      %s251 = sphi 0, %s249
      %s252 = sphi 0, %s251
      %s266 = sphi 0, %s252
      %s270 = sphi 0, %s270
      %s272 = sphi 0, %s270
      %s273 = sphi 0, %s272
      %s287 = sphi 0, %s273
      %s291 = sphi 0, %s291
      %s293 = sphi 0, %s291
      %s294 = sphi 0, %s293
      %s308 = sphi 0, %s294
      %s314 = sphi 0, %s316
      %s317 = sphi 0, %s314
      %s318 = sphi 0, %s317
      %s334 = sphi 0, %s318
    $region4: #{tpu_custom_call.1} parent=1 // loop_header_branch
      %29 = sbr.rel (%p27) target = $region8
    $region5: #{tpu_custom_call.1} parent=1 // loop_body
      %s31 = ssub.s32 %s26, 1
      %s32 = ssub.s32 %s26, 2
      %s33 = sadd.s32 %s26, 1
      %s34 = ssub.s32 %s26, %s33
      %p35 = scmp.eq.s32.totalorder %s34, 0
      %s37 = sadd.s32 %s36, 1
      %s38 = scalar_select %p35, %s36, %s37
      %p41 = pneg %p35
      %p42 = scmp.eq.s32.totalorder %s26, 1
      %p43 = por %p41, %p42
      %p44 = scmp.ne.s32.totalorder %s36, %s39
      %p45 = scmp.eq.s32.totalorder %s26, 0
      %p46 = por %p44, %p45
      %p47 = scmp.ne.s32.totalorder %s36, %s39
      %p48 = scmp.eq.s32.totalorder %s31, 1
      %p49 = por %p47, %p48
      %p50 = scmp.ne.s32.totalorder %s39, %s40
      %p51 = scmp.eq.s32.totalorder %s31, 0
      %p52 = por %p50, %p51
      %p53 = scmp.ne.s32.totalorder %s39, %s40
      %p54 = scmp.eq.s32.totalorder %s32, 1
      %p55 = por %p53, %p54
      %p57 = scmp.ne.s32.totalorder %s40, %s56
      %p58 = scmp.eq.s32.totalorder %s32, 0
      %p59 = por %p57, %p58
      %s61 = sadd.s32 %s60, 1
      %p64 = scmp.eq.s32.totalorder %s26, 1
      %p65 = scmp.ne.s32.totalorder %s60, %s62
      %p66 = scmp.eq.s32.totalorder %s26, 0
      %p67 = por %p65, %p66
      %p68 = scmp.ne.s32.totalorder %s60, %s62
      %p69 = scmp.eq.s32.totalorder %s31, 1
      %p70 = por %p68, %p69
      %p71 = scmp.ne.s32.totalorder %s62, %s63
      %p72 = scmp.eq.s32.totalorder %s31, 0
      %p73 = por %p71, %p72
      %p74 = scmp.ne.s32.totalorder %s62, %s63
      %p75 = scmp.eq.s32.totalorder %s32, 1
      %p76 = por %p74, %p75
      %p78 = scmp.ne.s32.totalorder %s63, %s77
      %p79 = scmp.eq.s32.totalorder %s32, 0
      %p80 = por %p78, %p79
      %s82 = sadd.s32 %s81, 1
      %p85 = scmp.eq.s32.totalorder %s26, 1
      %p86 = scmp.ne.s32.totalorder %s81, %s83
      %p87 = scmp.eq.s32.totalorder %s26, 0
      %p88 = por %p86, %p87
      %p89 = scmp.ne.s32.totalorder %s81, %s83
      %p90 = scmp.eq.s32.totalorder %s31, 1
      %p91 = por %p89, %p90
      %p92 = scmp.ne.s32.totalorder %s83, %s84
      %p93 = scmp.eq.s32.totalorder %s31, 0
      %p94 = por %p92, %p93
      %p95 = scmp.ne.s32.totalorder %s83, %s84
      %p96 = scmp.eq.s32.totalorder %s32, 1
      %p97 = por %p95, %p96
      %p99 = scmp.ne.s32.totalorder %s84, %s98
      %p100 = scmp.eq.s32.totalorder %s32, 0
      %p101 = por %p99, %p100
      %s103 = sadd.s32 %s102, 1
      %p106 = scmp.eq.s32.totalorder %s26, 1
      %p107 = scmp.ne.s32.totalorder %s102, %s104
      %p108 = scmp.eq.s32.totalorder %s26, 0
      %p109 = por %p107, %p108
      %p110 = scmp.ne.s32.totalorder %s102, %s104
      %p111 = scmp.eq.s32.totalorder %s31, 1
      %p112 = por %p110, %p111
      %p113 = scmp.ne.s32.totalorder %s104, %s105
      %p114 = scmp.eq.s32.totalorder %s31, 0
      %p115 = por %p113, %p114
      %p116 = scmp.ne.s32.totalorder %s104, %s105
      %p117 = scmp.eq.s32.totalorder %s32, 1
      %p118 = por %p116, %p117
      %p120 = scmp.ne.s32.totalorder %s105, %s119
      %p121 = scmp.eq.s32.totalorder %s32, 0
      %p122 = por %p120, %p121
      %s124 = sadd.s32 %s123, 1
      %p127 = scmp.eq.s32.totalorder %s26, 1
      %p128 = scmp.ne.s32.totalorder %s123, %s125
      %p129 = scmp.eq.s32.totalorder %s26, 0
      %p130 = por %p128, %p129
      %p131 = scmp.ne.s32.totalorder %s123, %s125
      %p132 = scmp.eq.s32.totalorder %s31, 1
      %p133 = por %p131, %p132
      %p134 = scmp.ne.s32.totalorder %s125, %s126
      %p135 = scmp.eq.s32.totalorder %s31, 0
      %p136 = por %p134, %p135
      %p137 = scmp.ne.s32.totalorder %s125, %s126
      %p138 = scmp.eq.s32.totalorder %s32, 1
      %p139 = por %p137, %p138
      %p141 = scmp.ne.s32.totalorder %s126, %s140
      %p142 = scmp.eq.s32.totalorder %s32, 0
      %p143 = por %p141, %p142
      %s145 = sadd.s32 %s144, 1
      %p148 = scmp.eq.s32.totalorder %s26, 1
      %p149 = scmp.ne.s32.totalorder %s144, %s146
      %p150 = scmp.eq.s32.totalorder %s26, 0
      %p151 = por %p149, %p150
      %p152 = scmp.ne.s32.totalorder %s144, %s146
      %p153 = scmp.eq.s32.totalorder %s31, 1
      %p154 = por %p152, %p153
      %p155 = scmp.ne.s32.totalorder %s146, %s147
      %p156 = scmp.eq.s32.totalorder %s31, 0
      %p157 = por %p155, %p156
      %p158 = scmp.ne.s32.totalorder %s146, %s147
      %p159 = scmp.eq.s32.totalorder %s32, 1
      %p160 = por %p158, %p159
      %p162 = scmp.ne.s32.totalorder %s147, %s161
      %p163 = scmp.eq.s32.totalorder %s32, 0
      %p164 = por %p162, %p163
      %s166 = sadd.s32 %s165, 1
      %p169 = scmp.eq.s32.totalorder %s26, 1
      %p170 = scmp.ne.s32.totalorder %s165, %s167
      %p171 = scmp.eq.s32.totalorder %s26, 0
      %p172 = por %p170, %p171
      %p173 = scmp.ne.s32.totalorder %s165, %s167
      %p174 = scmp.eq.s32.totalorder %s31, 1
      %p175 = por %p173, %p174
      %p176 = scmp.ne.s32.totalorder %s167, %s168
      %p177 = scmp.eq.s32.totalorder %s31, 0
      %p178 = por %p176, %p177
      %p179 = scmp.ne.s32.totalorder %s167, %s168
      %p180 = scmp.eq.s32.totalorder %s32, 1
      %p181 = por %p179, %p180
      %p183 = scmp.ne.s32.totalorder %s168, %s182
      %p184 = scmp.eq.s32.totalorder %s32, 0
      %p185 = por %p183, %p184
      %s187 = sadd.s32 %s186, 1
      %p190 = scmp.eq.s32.totalorder %s26, 1
      %p191 = scmp.ne.s32.totalorder %s186, %s188
      %p192 = scmp.eq.s32.totalorder %s26, 0
      %p193 = por %p191, %p192
      %p194 = scmp.ne.s32.totalorder %s186, %s188
      %p195 = scmp.eq.s32.totalorder %s31, 1
      %p196 = por %p194, %p195
      %p197 = scmp.ne.s32.totalorder %s188, %s189
      %p198 = scmp.eq.s32.totalorder %s31, 0
      %p199 = por %p197, %p198
      %p200 = scmp.ne.s32.totalorder %s188, %s189
      %p201 = scmp.eq.s32.totalorder %s32, 1
      %p202 = por %p200, %p201
      %p204 = scmp.ne.s32.totalorder %s189, %s203
      %p205 = scmp.eq.s32.totalorder %s32, 0
      %p206 = por %p204, %p205
      %s208 = sadd.s32 %s207, 1
      %p211 = scmp.eq.s32.totalorder %s26, 1
      %p212 = scmp.ne.s32.totalorder %s207, %s209
      %p213 = scmp.eq.s32.totalorder %s26, 0
      %p214 = por %p212, %p213
      %p215 = scmp.ne.s32.totalorder %s207, %s209
      %p216 = scmp.eq.s32.totalorder %s31, 1
      %p217 = por %p215, %p216
      %p218 = scmp.ne.s32.totalorder %s209, %s210
      %p219 = scmp.eq.s32.totalorder %s31, 0
      %p220 = por %p218, %p219
      %p221 = scmp.ne.s32.totalorder %s209, %s210
      %p222 = scmp.eq.s32.totalorder %s32, 1
      %p223 = por %p221, %p222
      %p225 = scmp.ne.s32.totalorder %s210, %s224
      %p226 = scmp.eq.s32.totalorder %s32, 0
      %p227 = por %p225, %p226
      %s229 = sadd.s32 %s228, 1
      %p232 = scmp.eq.s32.totalorder %s26, 1
      %p233 = scmp.ne.s32.totalorder %s228, %s230
      %p234 = scmp.eq.s32.totalorder %s26, 0
      %p235 = por %p233, %p234
      %p236 = scmp.ne.s32.totalorder %s228, %s230
      %p237 = scmp.eq.s32.totalorder %s31, 1
      %p238 = por %p236, %p237
      %p239 = scmp.ne.s32.totalorder %s230, %s231
      %p240 = scmp.eq.s32.totalorder %s31, 0
      %p241 = por %p239, %p240
      %p242 = scmp.ne.s32.totalorder %s230, %s231
      %p243 = scmp.eq.s32.totalorder %s32, 1
      %p244 = por %p242, %p243
      %p246 = scmp.ne.s32.totalorder %s231, %s245
      %p247 = scmp.eq.s32.totalorder %s32, 0
      %p248 = por %p246, %p247
      %s250 = sadd.s32 %s249, 1
      %p253 = scmp.eq.s32.totalorder %s26, 1
      %p254 = scmp.ne.s32.totalorder %s249, %s251
      %p255 = scmp.eq.s32.totalorder %s26, 0
      %p256 = por %p254, %p255
      %p257 = scmp.ne.s32.totalorder %s249, %s251
      %p258 = scmp.eq.s32.totalorder %s31, 1
      %p259 = por %p257, %p258
      %p260 = scmp.ne.s32.totalorder %s251, %s252
      %p261 = scmp.eq.s32.totalorder %s31, 0
      %p262 = por %p260, %p261
      %p263 = scmp.ne.s32.totalorder %s251, %s252
      %p264 = scmp.eq.s32.totalorder %s32, 1
      %p265 = por %p263, %p264
      %p267 = scmp.ne.s32.totalorder %s252, %s266
      %p268 = scmp.eq.s32.totalorder %s32, 0
      %p269 = por %p267, %p268
      %s271 = sadd.s32 %s270, 1
      %p274 = scmp.eq.s32.totalorder %s26, 1
      %p275 = scmp.ne.s32.totalorder %s270, %s272
      %p276 = scmp.eq.s32.totalorder %s26, 0
      %p277 = por %p275, %p276
      %p278 = scmp.ne.s32.totalorder %s270, %s272
      %p279 = scmp.eq.s32.totalorder %s31, 1
      %p280 = por %p278, %p279
      %p281 = scmp.ne.s32.totalorder %s272, %s273
      %p282 = scmp.eq.s32.totalorder %s31, 0
      %p283 = por %p281, %p282
      %p284 = scmp.ne.s32.totalorder %s272, %s273
      %p285 = scmp.eq.s32.totalorder %s32, 1
      %p286 = por %p284, %p285
      %p288 = scmp.ne.s32.totalorder %s273, %s287
      %p289 = scmp.eq.s32.totalorder %s32, 0
      %p290 = por %p288, %p289
      %s292 = sadd.s32 %s291, 1
      %p295 = scmp.eq.s32.totalorder %s26, 1
      %p296 = scmp.ne.s32.totalorder %s291, %s293
      %p297 = scmp.eq.s32.totalorder %s26, 0
      %p298 = por %p296, %p297
      %p299 = scmp.ne.s32.totalorder %s291, %s293
      %p300 = scmp.eq.s32.totalorder %s31, 1
      %p301 = por %p299, %p300
      %p302 = scmp.ne.s32.totalorder %s293, %s294
      %p303 = scmp.eq.s32.totalorder %s31, 0
      %p304 = por %p302, %p303
      %p305 = scmp.ne.s32.totalorder %s293, %s294
      %p306 = scmp.eq.s32.totalorder %s32, 1
      %p307 = por %p305, %p306
      %p309 = scmp.ne.s32.totalorder %s294, %s308
      %p310 = scmp.eq.s32.totalorder %s32, 0
      %p311 = por %p309, %p310
      %s312 = ssub.s32 %s26, %s33
      %p313 = scmp.eq.s32.totalorder %s312, 0
      %s315 = sadd.s32 %s314, 1
      %s316 = scalar_select %p313, %s314, %s315
      %p319 = pneg %p313
      %p320 = scmp.eq.s32.totalorder %s26, 1
      %p321 = por %p319, %p320
      %p322 = scmp.ne.s32.totalorder %s314, %s317
      %p323 = scmp.eq.s32.totalorder %s26, 0
      %p324 = por %p322, %p323
      %p325 = scmp.ne.s32.totalorder %s314, %s317
      %p326 = scmp.eq.s32.totalorder %s31, 1
      %p327 = por %p325, %p326
      %p328 = scmp.ne.s32.totalorder %s317, %s318
      %p329 = scmp.eq.s32.totalorder %s31, 0
      %p330 = por %p328, %p329
      %p331 = scmp.ne.s32.totalorder %s317, %s318
      %p332 = scmp.eq.s32.totalorder %s32, 1
      %p333 = por %p331, %p332
      %p335 = scmp.ne.s32.totalorder %s318, %s334
      %p336 = scmp.eq.s32.totalorder %s32, 0
      %p337 = por %p335, %p336
      %p338 = scmp.le.s32.totalorder 1, %s26
      %p339 = scmp.lt.s32.totalorder %s26, 3
      %p340 = pnand %p338, %p339
      %p341 = pneg %p340
      // Predicated region
      $region9: #{tpu_custom_call.1} parent=5 // pred_check
        _
      $region10: #{tpu_custom_call.1} parent=5 // pred_check_branch
        %343 = sbr.rel (%p340) target = $region12
      $region11: #{tpu_custom_call.1} parent=5 // pred_region
        %s344 = ssub.s32 %s26, 1
        // Predicated region
        $region13: #{tpu_custom_call.1} parent=11 // pred_check
          %p345 = pneg %p73
        $region14: #{tpu_custom_call.1} parent=11 // pred_check_branch
          %347 = sbr.rel (%p345) target = $region16
        $region15: #{tpu_custom_call.1} parent=11 // pred_region
          _
        $region16: #{tpu_custom_call.1} parent=11 // pred_fallthru
          _
        // Predicated region
        $region17: #{tpu_custom_call.1} parent=11 // pred_check
          %p348 = pneg %p94
        $region18: #{tpu_custom_call.1} parent=11 // pred_check_branch
          %350 = sbr.rel (%p348) target = $region20
        $region19: #{tpu_custom_call.1} parent=11 // pred_region
          %s352 = ssub.s32 16, 16
          %353 = vsyncadd [#allocation6], %s352
          %s355 = sshll.u32 [#allocation5], 4
          %s356 = int_to_ptr.vmem [resolvable:$true] %s355
          %358 = dma.hbm_to_vmem [thread:$0]  %s2, 16, %s356, [#allocation6]
        $region20: #{tpu_custom_call.1} parent=11 // pred_fallthru
          _
        // Predicated region
        $region21: #{tpu_custom_call.1} parent=11 // pred_check
          %p359 = pneg %p115
        $region22: #{tpu_custom_call.1} parent=11 // pred_check_branch
          %361 = sbr.rel (%p359) target = $region24
        $region23: #{tpu_custom_call.1} parent=11 // pred_region
          _
        $region24: #{tpu_custom_call.1} parent=11 // pred_fallthru
          _
        // Predicated region
        $region25: #{tpu_custom_call.1} parent=11 // pred_check
          %p362 = pneg %p136
        $region26: #{tpu_custom_call.1} parent=11 // pred_check_branch
          %364 = sbr.rel (%p362) target = $region28
        $region27: #{tpu_custom_call.1} parent=11 // pred_region
          _
        $region28: #{tpu_custom_call.1} parent=11 // pred_fallthru
          _
        // Predicated region
        $region29: #{tpu_custom_call.1} parent=11 // pred_check
          %p365 = pneg %p157
        $region30: #{tpu_custom_call.1} parent=11 // pred_check_branch
          %367 = sbr.rel (%p365) target = $region32
        $region31: #{tpu_custom_call.1} parent=11 // pred_region
          _
        $region32: #{tpu_custom_call.1} parent=11 // pred_fallthru
          _
        // Predicated region
        $region33: #{tpu_custom_call.1} parent=11 // pred_check
          %p368 = pneg %p178
        $region34: #{tpu_custom_call.1} parent=11 // pred_check_branch
          %370 = sbr.rel (%p368) target = $region36
        $region35: #{tpu_custom_call.1} parent=11 // pred_region
          _
        $region36: #{tpu_custom_call.1} parent=11 // pred_fallthru
          _
        // Predicated region
        $region37: #{tpu_custom_call.1} parent=11 // pred_check
          %p371 = pneg %p199
        $region38: #{tpu_custom_call.1} parent=11 // pred_check_branch
          %373 = sbr.rel (%p371) target = $region40
        $region39: #{tpu_custom_call.1} parent=11 // pred_region
          _
        $region40: #{tpu_custom_call.1} parent=11 // pred_fallthru
          _
        // Predicated region
        $region41: #{tpu_custom_call.1} parent=11 // pred_check
          %p374 = pneg %p220
        $region42: #{tpu_custom_call.1} parent=11 // pred_check_branch
          %376 = sbr.rel (%p374) target = $region44
        $region43: #{tpu_custom_call.1} parent=11 // pred_region
          _
        $region44: #{tpu_custom_call.1} parent=11 // pred_fallthru
          _
        // Predicated region
        $region45: #{tpu_custom_call.1} parent=11 // pred_check
          %p377 = pneg %p241
        $region46: #{tpu_custom_call.1} parent=11 // pred_check_branch
          %379 = sbr.rel (%p377) target = $region48
        $region47: #{tpu_custom_call.1} parent=11 // pred_region
          _
        $region48: #{tpu_custom_call.1} parent=11 // pred_fallthru
          _
        // Predicated region
        $region49: #{tpu_custom_call.1} parent=11 // pred_check
          %p380 = pneg %p262
        $region50: #{tpu_custom_call.1} parent=11 // pred_check_branch
          %382 = sbr.rel (%p380) target = $region52
        $region51: #{tpu_custom_call.1} parent=11 // pred_region
          _
        $region52: #{tpu_custom_call.1} parent=11 // pred_fallthru
          _
        // Predicated region
        $region53: #{tpu_custom_call.1} parent=11 // pred_check
          %p383 = pneg %p283
        $region54: #{tpu_custom_call.1} parent=11 // pred_check_branch
          %385 = sbr.rel (%p383) target = $region56
        $region55: #{tpu_custom_call.1} parent=11 // pred_region
          _
        $region56: #{tpu_custom_call.1} parent=11 // pred_fallthru
          _
        // Predicated region
        $region57: #{tpu_custom_call.1} parent=11 // pred_check
          %p386 = pneg %p304
        $region58: #{tpu_custom_call.1} parent=11 // pred_check_branch
          %388 = sbr.rel (%p386) target = $region60
        $region59: #{tpu_custom_call.1} parent=11 // pred_region
          _
        $region60: #{tpu_custom_call.1} parent=11 // pred_fallthru
          _
      $region12: #{tpu_custom_call.1} parent=5 // pred_fallthru
        _
      %p389 = scmp.lt.s32.totalorder %s26, 2
      // Predicated region
      $region61: #{tpu_custom_call.1} parent=5 // pred_check
        %p390 = pneg %p389
      $region62: #{tpu_custom_call.1} parent=5 // pred_check_branch
        %392 = sbr.rel (%p390) target = $region64
      $region63: #{tpu_custom_call.1} parent=5 // pred_region
        // Predicated region
        $region65: #{tpu_custom_call.1} parent=63 // pred_check
          %p393 = pneg %p46
        $region66: #{tpu_custom_call.1} parent=63 // pred_check_branch
          %395 = sbr.rel (%p393) target = $region68
        $region67: #{tpu_custom_call.1} parent=63 // pred_region
          %s396 = sand.u32 %s36, 1
          %s397 = scalar_lea.sflag [#allocation3], %s396
          %s398 = sand.u32 %s36, 1
          %s399 = smul.addr %s398, 8
          %s400 = scalar_lea.vmem [#allocation2], %s399
          %s402 = ssub.s32 128, 128
          %403 = vsyncadd %s397, %s402
          %s404 = smul.addr %s26, 128
          %s405 = scalar_lea.hbm %s0, %s404
          %s407 = sshll.u32 %s400, 4
          %s408 = int_to_ptr.vmem [resolvable:$true] %s407
          %410 = dma.hbm_to_vmem [thread:$0]  %s405, 128, %s408, %s397
        $region68: #{tpu_custom_call.1} parent=63 // pred_fallthru
          _
      $region64: #{tpu_custom_call.1} parent=5 // pred_fallthru
        _
      %p411 = scmp.le.s32.totalorder 1, %s26
      %p412 = scmp.lt.s32.totalorder %s26, 3
      %p413 = pnand %p411, %p412
      %p414 = pneg %p413
      // Predicated region
      $region69: #{tpu_custom_call.1} parent=5 // pred_check
        _
      $region70: #{tpu_custom_call.1} parent=5 // pred_check_branch
        %416 = sbr.rel (%p413) target = $region72
      $region71: #{tpu_custom_call.1} parent=5 // pred_region
        %s417 = ssub.s32 %s26, 1
        %s418 = sand.u32 %s39, 1
        %s419 = scalar_lea.sflag [#allocation3], %s418
        %s420 = sand.u32 %s39, 1
        %s421 = smul.addr %s420, 8
        %s422 = scalar_lea.vmem [#allocation2], %s421
        // Predicated region
        $region73: #{tpu_custom_call.1} parent=71 // pred_check
          %p423 = pneg %p52
        $region74: #{tpu_custom_call.1} parent=71 // pred_check_branch
          %425 = sbr.rel (%p423) target = $region76
        $region75: #{tpu_custom_call.1} parent=71 // pred_region
          %426 = dma.done %s419, 128
        $region76: #{tpu_custom_call.1} parent=71 // pred_fallthru
          _
        // Predicated region
        $region77: #{tpu_custom_call.1} parent=71 // pred_check
          %p427 = pneg %p94
        $region78: #{tpu_custom_call.1} parent=71 // pred_check_branch
          %429 = sbr.rel (%p427) target = $region80
        $region79: #{tpu_custom_call.1} parent=71 // pred_region
          %430 = dma.done [#allocation6], 16
        $region80: #{tpu_custom_call.1} parent=71 // pred_fallthru
          _
        %s431 = sand.u32 %s39, 1
        %s432 = scalar_lea.sflag [#allocation3], %s431
        %s433 = sand.u32 %s39, 1
        %s434 = smul.addr %s433, 8
        %s435 = scalar_lea.vmem [#allocation2], %s434
        %p436 = pneg %p52
        %p437 = pneg %p49
        %p438 = pneg %p73
        %p439 = pneg %p70
        %p440 = pneg %p94
        %p441 = pneg %p91
        %p442 = pneg %p115
        %p443 = pneg %p112
        %p444 = pneg %p136
        %p445 = pneg %p133
        %p446 = pneg %p157
        %p447 = pneg %p154
        %p448 = pneg %p178
        %p449 = pneg %p175
        %p450 = pneg %p199
        %p451 = pneg %p196
        %p452 = pneg %p220
        %p453 = pneg %p217
        %p454 = pneg %p241
        %p455 = pneg %p238
        %p456 = pneg %p262
        %p457 = pneg %p259
        %p458 = pneg %p283
        %p459 = pneg %p280
        %p460 = pneg %p304
        %p461 = pneg %p301
        %p462 = pneg %p330
        %p463 = pneg %p327
        %s464 = sand.u32 %s317, 1
        %s465 = scalar_lea.sflag [#allocation4], %s464
        %s466 = sand.u32 %s317, 1
        %s467 = smul.addr %s466, 8
        %s468 = scalar_lea.vmem [#allocation7], %s467
        %v470 = vld [vmem:[%s422] sm:$0xff]
        %v471 = vld [vmem:[%s1] sm:$0x1]
        %v472 = vld [vmem:[#allocation5] sm:$0x1]
        %vm473 = vcmask 392192
        %v474 = vsel %vm473, %v470, 0.0
        %475 = vadd.xlane.f32.xlu0 %v474
        %v476 = vpop.xlane.xlu0 %475
        %v477 = vrcp.pop 48.0
        %v478 = vmul.f32 %v476, %v477
        %v479 = vsub.f32 %v470, %v478
        %v480 = vmul.f32 %v479, %v479
        %v481 = vsel %vm473, %v480, 0.0
        %482 = vadd.xlane.f32.xlu0 %v481
        %v483 = vpop.xlane.xlu0 %482
        %v484 = vmul.f32 %v483, %v477
        %v485 = vadd.f32 %v484, 1e-05
        %v486 = vrsqrt.pop %v485
        %v487 = vmul.f32 %v479, %v486
        %v489 = vlaneseq
        %v490 = vshrl.u32 %v489, 7
        %v491 = vsub.s32 0, %v490
        %v492 = vrot.slane %v471, %v491
        %v494 = vmul.f32 %v487, %v492
        %v496 = vlaneseq
        %v497 = vshrl.u32 %v496, 7
        %v498 = vsub.s32 0, %v497
        %v499 = vrot.slane %v472, %v498
        %v501 = vadd.f32 %v494, %v499
        %v502 = vpack.c.bf16 %v501, %v501
        %v503 = vld [vmem:[%s3] sm:$0xff]
        %v504 = vld [vmem:[%s3 + $0x8] sm:$0xff]
        %v505 = vld [vmem:[%s3 + $0x10] sm:$0xff]
        %v506 = vld [vmem:[%s3 + $0x18] sm:$0xff]
        %v507 = vld [vmem:[%s3 + $0x20] sm:$0xff]
        %v508 = vld [vmem:[%s3 + $0x28] sm:$0xff]
        %v509 = vld [vmem:[%s4] sm:$0x3]
        %v511 = vlaneseq
        %v512 = vshrl.u32 %v511, 7
        %v513 = vsub.s32 0, %v512
        %v514 = vrot.slane %v509, %v513
        %v515 = vlaneseq
        %v516 = vshrl.u32 %v515, 7
        %v517 = vsub.s32 1, %v516
        %v518 = vrot.slane %v509, %v517
        %v527 = vunpack.c.l.b16 %v503
        %v528 = vunpack.c.h.b16 %v503
        %v529 = vunpack.c.l.b16 %v504
        %v530 = vunpack.c.h.b16 %v504
        %v531 = vunpack.c.l.b16 %v505
        %v532 = vunpack.c.h.b16 %v505
        %v533 = vunpack.c.l.b16 %v506
        %v534 = vunpack.c.h.b16 %v506
        %v535 = vunpack.c.l.b16 %v507
        %v536 = vunpack.c.h.b16 %v507
        %v537 = vunpack.c.l.b16 %v508
        %v538 = vunpack.c.h.b16 %v508
        %v539 = vpack.c.b16 %v529, %v527
        %v540 = vpack.c.b16 %v530, %v528
        %v541 = vpack.c.b16 %v533, %v531
        %v542 = vpack.c.b16 %v534, %v532
        %v543 = vpack.c.b16 %v537, %v535
        %v544 = vpack.c.b16 %v538, %v536
        %v552 = vsel %vm473, %v502, 0
        %554 = vmatprep.subr.bf16.mxu0 %v540
        %555 = vmatpush1.bf16.msra.mxu0 %v539
        %556 = vmatprep.subr.bf16.mxu0 %v542
        %557 = vmatpush1.bf16.msra.mxu0 %v541
        %558 = vmatprep.subr.bf16.mxu0 %v544
        %559 = vmatpush1.bf16.msra.mxu0 %v543
        %560 = vmatprep.subr.bf16.mxu0 0
        %561 = vmatpush1.bf16.msra.mxu0 0
        %562 = vmatprep.subr.bf16.mxu0 0
        %563 = vmatpush1.bf16.msra.mxu0 0
        %564 = vmatprep.subr.bf16.mxu0 0
        %565 = vmatpush1.bf16.msra.mxu0 0
        %566 = vmatprep.subr.bf16.mxu0 0
        %567 = vmatpush1.bf16.msra.mxu0 0
        %568 = vmatprep.subr.bf16.mxu0 0
        %569 = vmatpush1.bf16.msra.mxu0 0
        %570 = vmatprep.subr.bf16.mxu0 0
        %571 = vmatpush1.bf16.msra.mxu0 0
        %572 = vmatprep.subr.bf16.mxu0 0
        %573 = vmatpush1.bf16.msra.mxu0 0
        %574 = vmatprep.subr.bf16.mxu0 0
        %575 = vmatpush1.bf16.msra.mxu0 0
        %576 = vmatprep.subr.bf16.mxu0 0
        %577 = vmatpush1.bf16.msra.mxu0 0
        %578 = vmatprep.subr.bf16.mxu0 0
        %579 = vmatpush1.bf16.msra.mxu0 0
        %580 = vmatprep.subr.bf16.mxu0 0
        %581 = vmatpush1.bf16.msra.mxu0 0
        %582 = vmatprep.subr.bf16.mxu0 0
        %583 = vmatpush1.bf16.msra.mxu0 0
        %584 = vmatprep.subr.bf16.mxu0 0
        %585 = vmatpush1.bf16.msra.mxu0 0
        %586 = vmatprep.mubr.bf16.mxu0 0
        %587 = vmatmul.mubr.bf16.gmra.mrb[0].mxu0 %v552
        %v588 = vpop.f32.mrb[0].mxu0
        %v589 = vadd.f32 %v514, %v588
        %v590 = vpop.f32.mrb[0].mxu0
        %v591 = vadd.f32 %v518, %v590
        %v592 = vpop.f32.mrb[0].mxu0
        %v593 = vpop.f32.mrb[0].mxu0
        %594 = vdwg.mxu0
        %v595 = vpack.c.bf16 %v589, %v589
        %597 = vrot.lane.b32.xlu0 %v595, 80
        %v598 = vpop.permute.xlu0 %597
        %vm599 = vcmask 97280
        %v601 = vsel %vm599, %v595, 0
        %v604 = vsel %vm599, %v598, 0
        %606 = vmatprep.subr.bf16.mxu0 0
        %607 = vmatpush1.bf16.xpose.msra.mxu0 %v604
        %608 = vmatprep.subr.bf16.mxu0 0
        %609 = vmatpush1.bf16.xpose.msra.mxu0 0
        %610 = vmatprep.subr.bf16.mxu0 0
        %611 = vmatpush1.bf16.xpose.msra.mxu0 0
        %612 = vmatprep.subr.bf16.mxu0 0
        %613 = vmatpush1.bf16.xpose.msra.mxu0 0
        %614 = vmatprep.subr.bf16.mxu0 0
        %615 = vmatpush1.bf16.xpose.msra.mxu0 0
        %616 = vmatprep.subr.bf16.mxu0 0
        %617 = vmatpush1.bf16.xpose.msra.mxu0 0
        %618 = vmatprep.subr.bf16.mxu0 0
        %619 = vmatpush1.bf16.xpose.msra.mxu0 0
        %620 = vmatprep.subr.bf16.mxu0 0
        %621 = vmatpush1.bf16.xpose.msra.mxu0 0
        %622 = vmatprep.subr.bf16.mxu0 0
        %623 = vmatpush1.bf16.xpose.msra.mxu0 0
        %624 = vmatprep.subr.bf16.mxu0 0
        %625 = vmatpush1.bf16.xpose.msra.mxu0 0
        %626 = vmatprep.subr.bf16.mxu0 0
        %627 = vmatpush1.bf16.xpose.msra.mxu0 0
        %628 = vmatprep.subr.bf16.mxu0 0
        %629 = vmatpush1.bf16.xpose.msra.mxu0 0
        %630 = vmatprep.subr.bf16.mxu0 0
        %631 = vmatpush1.bf16.xpose.msra.mxu0 0
        %632 = vmatprep.subr.bf16.mxu0 0
        %633 = vmatpush1.bf16.xpose.msra.mxu0 0
        %634 = vmatprep.subr.bf16.mxu0 0
        %635 = vmatpush1.bf16.xpose.msra.mxu0 0
        %636 = vmatprep.subr.bf16.mxu0 0
        %637 = vmatpush1.bf16.xpose.msra.mxu0 0
        %638 = vmatprep.mubr.bf16.mxu0 0
        %639 = vmatmul.mubr.bf16.gmra.mrb[0].mxu0 %v601
        %v640 = vpop.f32.mrb[0].mxu0
        %v641 = vadd.f32 0.0, %v640
        %v642 = vpop.f32.mrb[0].mxu0
        %v643 = vpop.f32.mrb[0].mxu0
        %v644 = vpop.f32.mrb[0].mxu0
        %645 = vdwg.mxu0
        %vm646 = vcmask 64512
        %v647 = vsel %vm646, %v641, -inf
        %648 = vmax.xlane.f32.xlu0 %v647
        %v649 = vpop.xlane.xlu0 %648
        %v650 = vsub.f32 %v641, %v649
        %v651 = vmul.f32 %v650, 1.442695
        %v652 = vpow.pop %v651
        %v653 = vsel %vm646, %v652, 0.0
        %654 = vadd.xlane.f32.xlu0 %v653
        %v655 = vpop.xlane.xlu0 %654
        %v656 = vrcp.pop %v655
        %v657 = vmul.f32 %v652, %v656
        %v658 = vpack.c.bf16 %v657, %v657
        %659 = vrot.lane.b32.xlu0 %v595, 32
        %v660 = vpop.permute.xlu0 %659
        %v662 = vsel %vm646, %v658, 0
        %vm664 = vcmask 1043456
        %v666 = vsel %vm664, %v660, 0
        %668 = vmatprep.subr.bf16.mxu0 0
        %669 = vmatpush1.bf16.msra.mxu0 %v666
        %670 = vmatprep.subr.bf16.mxu0 0
        %671 = vmatpush1.bf16.msra.mxu0 0
        %672 = vmatprep.subr.bf16.mxu0 0
        %673 = vmatpush1.bf16.msra.mxu0 0
        %674 = vmatprep.subr.bf16.mxu0 0
        %675 = vmatpush1.bf16.msra.mxu0 0
        %676 = vmatprep.subr.bf16.mxu0 0
        %677 = vmatpush1.bf16.msra.mxu0 0
        %678 = vmatprep.subr.bf16.mxu0 0
        %679 = vmatpush1.bf16.msra.mxu0 0
        %680 = vmatprep.subr.bf16.mxu0 0
        %681 = vmatpush1.bf16.msra.mxu0 0
        %682 = vmatprep.subr.bf16.mxu0 0
        %683 = vmatpush1.bf16.msra.mxu0 0
        %684 = vmatprep.subr.bf16.mxu0 0
        %685 = vmatpush1.bf16.msra.mxu0 0
        %686 = vmatprep.subr.bf16.mxu0 0
        %687 = vmatpush1.bf16.msra.mxu0 0
        %688 = vmatprep.subr.bf16.mxu0 0
        %689 = vmatpush1.bf16.msra.mxu0 0
        %690 = vmatprep.subr.bf16.mxu0 0
        %691 = vmatpush1.bf16.msra.mxu0 0
        %692 = vmatprep.subr.bf16.mxu0 0
        %693 = vmatpush1.bf16.msra.mxu0 0
        %694 = vmatprep.subr.bf16.mxu0 0
        %695 = vmatpush1.bf16.msra.mxu0 0
        %696 = vmatprep.subr.bf16.mxu0 0
        %697 = vmatpush1.bf16.msra.mxu0 0
        %698 = vmatprep.subr.bf16.mxu0 0
        %699 = vmatpush1.bf16.msra.mxu0 0
        %700 = vmatprep.mubr.bf16.mxu0 0
        %701 = vmatmul.mubr.bf16.gmra.mrb[0].mxu0 %v662
        %v702 = vpop.f32.mrb[0].mxu0
        %v703 = vadd.f32 0.0, %v702
        %v704 = vpop.f32.mrb[0].mxu0
        %v705 = vpop.f32.mrb[0].mxu0
        %v706 = vpop.f32.mrb[0].mxu0
        %707 = vdwg.mxu0
        %708 = vrot.lane.b32.xlu0 %v595, 116
        %v709 = vpop.permute.xlu0 %708
        %710 = vrot.lane.b32.xlu0 %v595, 68
        %v711 = vpop.permute.xlu0 %710
        %v713 = vsel %vm599, %v709, 0
        %v716 = vsel %vm599, %v711, 0
        %718 = vmatprep.subr.bf16.mxu0 0
        %719 = vmatpush1.bf16.xpose.msra.mxu0 %v716
        %720 = vmatprep.subr.bf16.mxu0 0
        %721 = vmatpush1.bf16.xpose.msra.mxu0 0
        %722 = vmatprep.subr.bf16.mxu0 0
        %723 = vmatpush1.bf16.xpose.msra.mxu0 0
        %724 = vmatprep.subr.bf16.mxu0 0
        %725 = vmatpush1.bf16.xpose.msra.mxu0 0
        %726 = vmatprep.subr.bf16.mxu0 0
        %727 = vmatpush1.bf16.xpose.msra.mxu0 0
        %728 = vmatprep.subr.bf16.mxu0 0
        %729 = vmatpush1.bf16.xpose.msra.mxu0 0
        %730 = vmatprep.subr.bf16.mxu0 0
        %731 = vmatpush1.bf16.xpose.msra.mxu0 0
        %732 = vmatprep.subr.bf16.mxu0 0
        %733 = vmatpush1.bf16.xpose.msra.mxu0 0
        %734 = vmatprep.subr.bf16.mxu0 0
        %735 = vmatpush1.bf16.xpose.msra.mxu0 0
        %736 = vmatprep.subr.bf16.mxu0 0
        %737 = vmatpush1.bf16.xpose.msra.mxu0 0
        %738 = vmatprep.subr.bf16.mxu0 0
        %739 = vmatpush1.bf16.xpose.msra.mxu0 0
        %740 = vmatprep.subr.bf16.mxu0 0
        %741 = vmatpush1.bf16.xpose.msra.mxu0 0
        %742 = vmatprep.subr.bf16.mxu0 0
        %743 = vmatpush1.bf16.xpose.msra.mxu0 0
        %744 = vmatprep.subr.bf16.mxu0 0
        %745 = vmatpush1.bf16.xpose.msra.mxu0 0
        %746 = vmatprep.subr.bf16.mxu0 0
        %747 = vmatpush1.bf16.xpose.msra.mxu0 0
        %748 = vmatprep.subr.bf16.mxu0 0
        %749 = vmatpush1.bf16.xpose.msra.mxu0 0
        %750 = vmatprep.mubr.bf16.mxu0 0
        %751 = vmatmul.mubr.bf16.gmra.mrb[0].mxu0 %v713
        %v752 = vpop.f32.mrb[0].mxu0
        %v753 = vadd.f32 0.0, %v752
        %v754 = vpop.f32.mrb[0].mxu0
        %v755 = vpop.f32.mrb[0].mxu0
        %v756 = vpop.f32.mrb[0].mxu0
        %757 = vdwg.mxu0
        %v758 = vsel %vm646, %v753, -inf
        %759 = vmax.xlane.f32.xlu0 %v758
        %v760 = vpop.xlane.xlu0 %759
        %v761 = vsub.f32 %v753, %v760
        %v762 = vmul.f32 %v761, 1.442695
        %v763 = vpow.pop %v762
        %v764 = vsel %vm646, %v763, 0.0
        %765 = vadd.xlane.f32.xlu0 %v764
        %v766 = vpop.xlane.xlu0 %765
        %v767 = vrcp.pop %v766
        %v768 = vmul.f32 %v763, %v767
        %v769 = vpack.c.bf16 %v768, %v768
        %770 = vrot.lane.b32.xlu0 %v595, 20
        %v771 = vpop.permute.xlu0 %770
        %v773 = vsel %vm646, %v769, 0
        %v776 = vsel %vm664, %v771, 0
        %778 = vmatprep.subr.bf16.mxu0 0
        %779 = vmatpush1.bf16.msra.mxu0 %v776
        %780 = vmatprep.subr.bf16.mxu0 0
        %781 = vmatpush1.bf16.msra.mxu0 0
        %782 = vmatprep.subr.bf16.mxu0 0
        %783 = vmatpush1.bf16.msra.mxu0 0
        %784 = vmatprep.subr.bf16.mxu0 0
        %785 = vmatpush1.bf16.msra.mxu0 0
        %786 = vmatprep.subr.bf16.mxu0 0
        %787 = vmatpush1.bf16.msra.mxu0 0
        %788 = vmatprep.subr.bf16.mxu0 0
        %789 = vmatpush1.bf16.msra.mxu0 0
        %790 = vmatprep.subr.bf16.mxu0 0
        %791 = vmatpush1.bf16.msra.mxu0 0
        %792 = vmatprep.subr.bf16.mxu0 0
        %793 = vmatpush1.bf16.msra.mxu0 0
        %794 = vmatprep.subr.bf16.mxu0 0
        %795 = vmatpush1.bf16.msra.mxu0 0
        %796 = vmatprep.subr.bf16.mxu0 0
        %797 = vmatpush1.bf16.msra.mxu0 0
        %798 = vmatprep.subr.bf16.mxu0 0
        %799 = vmatpush1.bf16.msra.mxu0 0
        %800 = vmatprep.subr.bf16.mxu0 0
        %801 = vmatpush1.bf16.msra.mxu0 0
        %802 = vmatprep.subr.bf16.mxu0 0
        %803 = vmatpush1.bf16.msra.mxu0 0
        %804 = vmatprep.subr.bf16.mxu0 0
        %805 = vmatpush1.bf16.msra.mxu0 0
        %806 = vmatprep.subr.bf16.mxu0 0
        %807 = vmatpush1.bf16.msra.mxu0 0
        %808 = vmatprep.subr.bf16.mxu0 0
        %809 = vmatpush1.bf16.msra.mxu0 0
        %810 = vmatprep.mubr.bf16.mxu0 0
        %811 = vmatmul.mubr.bf16.gmra.mrb[0].mxu0 %v773
        %v812 = vpop.f32.mrb[0].mxu0
        %v813 = vadd.f32 0.0, %v812
        %v814 = vpop.f32.mrb[0].mxu0
        %v815 = vpop.f32.mrb[0].mxu0
        %v816 = vpop.f32.mrb[0].mxu0
        %817 = vdwg.mxu0
        %v818 = vpack.c.bf16 %v591, %v591
        %819 = vrot.lane.b32.xlu0 %v595, 104
        %v820 = vpop.permute.xlu0 %819
        %821 = vrot.lane.b32.xlu0 %v595, 56
        %v822 = vpop.permute.xlu0 %821
        %v824 = vsel %vm599, %v820, 0
        %v827 = vsel %vm599, %v822, 0
        %829 = vmatprep.subr.bf16.mxu0 0
        %830 = vmatpush1.bf16.xpose.msra.mxu0 %v827
        %831 = vmatprep.subr.bf16.mxu0 0
        %832 = vmatpush1.bf16.xpose.msra.mxu0 0
        %833 = vmatprep.subr.bf16.mxu0 0
        %834 = vmatpush1.bf16.xpose.msra.mxu0 0
        %835 = vmatprep.subr.bf16.mxu0 0
        %836 = vmatpush1.bf16.xpose.msra.mxu0 0
        %837 = vmatprep.subr.bf16.mxu0 0
        %838 = vmatpush1.bf16.xpose.msra.mxu0 0
        %839 = vmatprep.subr.bf16.mxu0 0
        %840 = vmatpush1.bf16.xpose.msra.mxu0 0
        %841 = vmatprep.subr.bf16.mxu0 0
        %842 = vmatpush1.bf16.xpose.msra.mxu0 0
        %843 = vmatprep.subr.bf16.mxu0 0
        %844 = vmatpush1.bf16.xpose.msra.mxu0 0
        %845 = vmatprep.subr.bf16.mxu0 0
        %846 = vmatpush1.bf16.xpose.msra.mxu0 0
        %847 = vmatprep.subr.bf16.mxu0 0
        %848 = vmatpush1.bf16.xpose.msra.mxu0 0
        %849 = vmatprep.subr.bf16.mxu0 0
        %850 = vmatpush1.bf16.xpose.msra.mxu0 0
        %851 = vmatprep.subr.bf16.mxu0 0
        %852 = vmatpush1.bf16.xpose.msra.mxu0 0
        %853 = vmatprep.subr.bf16.mxu0 0
        %854 = vmatpush1.bf16.xpose.msra.mxu0 0
        %855 = vmatprep.subr.bf16.mxu0 0
        %856 = vmatpush1.bf16.xpose.msra.mxu0 0
        %857 = vmatprep.subr.bf16.mxu0 0
        %858 = vmatpush1.bf16.xpose.msra.mxu0 0
        %859 = vmatprep.subr.bf16.mxu0 0
        %860 = vmatpush1.bf16.xpose.msra.mxu0 0
        %861 = vmatprep.mubr.bf16.mxu0 0
        %862 = vmatmul.mubr.bf16.gmra.mrb[0].mxu0 %v824
        %v863 = vpop.f32.mrb[0].mxu0
        %v864 = vadd.f32 0.0, %v863
        %v865 = vpop.f32.mrb[0].mxu0
        %v866 = vpop.f32.mrb[0].mxu0
        %v867 = vpop.f32.mrb[0].mxu0
        %868 = vdwg.mxu0
        %v869 = vsel %vm646, %v864, -inf
        %870 = vmax.xlane.f32.xlu0 %v869
        %v871 = vpop.xlane.xlu0 %870
        %v872 = vsub.f32 %v864, %v871
        %v873 = vmul.f32 %v872, 1.442695
        %v874 = vpow.pop %v873
        %v875 = vsel %vm646, %v874, 0.0
        %876 = vadd.xlane.f32.xlu0 %v875
        %v877 = vpop.xlane.xlu0 %876
        %v878 = vrcp.pop %v877
        %v879 = vmul.f32 %v874, %v878
        %v880 = vpack.c.bf16 %v879, %v879
        %882 = vrot.lane.b32.xlu0 %v595, 8
        %v883 = vpop.permute.xlu0 %882
        %884 = vrot.lane.b32.xlu0 %v818, 8
        %v885 = vpop.permute.xlu0 %884
        %vm886 = vcmask 64512
        %v887 = vsel %vm886, %v883, %v885
        %v889 = vsel %vm646, %v880, 0
        %v892 = vsel %vm664, %v887, 0
        %894 = vmatprep.subr.bf16.mxu0 0
        %895 = vmatpush1.bf16.msra.mxu0 %v892
        %896 = vmatprep.subr.bf16.mxu0 0
        %897 = vmatpush1.bf16.msra.mxu0 0
        %898 = vmatprep.subr.bf16.mxu0 0
        %899 = vmatpush1.bf16.msra.mxu0 0
        %900 = vmatprep.subr.bf16.mxu0 0
        %901 = vmatpush1.bf16.msra.mxu0 0
        %902 = vmatprep.subr.bf16.mxu0 0
        %903 = vmatpush1.bf16.msra.mxu0 0
        %904 = vmatprep.subr.bf16.mxu0 0
        %905 = vmatpush1.bf16.msra.mxu0 0
        %906 = vmatprep.subr.bf16.mxu0 0
        %907 = vmatpush1.bf16.msra.mxu0 0
        %908 = vmatprep.subr.bf16.mxu0 0
        %909 = vmatpush1.bf16.msra.mxu0 0
        %910 = vmatprep.subr.bf16.mxu0 0
        %911 = vmatpush1.bf16.msra.mxu0 0
        %912 = vmatprep.subr.bf16.mxu0 0
        %913 = vmatpush1.bf16.msra.mxu0 0
        %914 = vmatprep.subr.bf16.mxu0 0
        %915 = vmatpush1.bf16.msra.mxu0 0
        %916 = vmatprep.subr.bf16.mxu0 0
        %917 = vmatpush1.bf16.msra.mxu0 0
        %918 = vmatprep.subr.bf16.mxu0 0
        %919 = vmatpush1.bf16.msra.mxu0 0
        %920 = vmatprep.subr.bf16.mxu0 0
        %921 = vmatpush1.bf16.msra.mxu0 0
        %922 = vmatprep.subr.bf16.mxu0 0
        %923 = vmatpush1.bf16.msra.mxu0 0
        %924 = vmatprep.subr.bf16.mxu0 0
        %925 = vmatpush1.bf16.msra.mxu0 0
        %926 = vmatprep.mubr.bf16.mxu0 0
        %927 = vmatmul.mubr.bf16.gmra.mrb[0].mxu0 %v889
        %v928 = vpop.f32.mrb[0].mxu0
        %v929 = vadd.f32 0.0, %v928
        %v930 = vpop.f32.mrb[0].mxu0
        %v931 = vpop.f32.mrb[0].mxu0
        %v932 = vpop.f32.mrb[0].mxu0
        %933 = vdwg.mxu0
        %934 = vrot.lane.b32.xlu0 %v595, 92
        %v935 = vpop.permute.xlu0 %934
        %936 = vrot.lane.b32.xlu0 %v595, 44
        %v937 = vpop.permute.xlu0 %936
        %v939 = vsel %vm599, %v935, 0
        %v942 = vsel %vm599, %v937, 0
        %944 = vmatprep.subr.bf16.mxu0 0
        %945 = vmatpush1.bf16.xpose.msra.mxu0 %v942
        %946 = vmatprep.subr.bf16.mxu0 0
        %947 = vmatpush1.bf16.xpose.msra.mxu0 0
        %948 = vmatprep.subr.bf16.mxu0 0
        %949 = vmatpush1.bf16.xpose.msra.mxu0 0
        %950 = vmatprep.subr.bf16.mxu0 0
        %951 = vmatpush1.bf16.xpose.msra.mxu0 0
        %952 = vmatprep.subr.bf16.mxu0 0
        %953 = vmatpush1.bf16.xpose.msra.mxu0 0
        %954 = vmatprep.subr.bf16.mxu0 0
        %955 = vmatpush1.bf16.xpose.msra.mxu0 0
        %956 = vmatprep.subr.bf16.mxu0 0
        %957 = vmatpush1.bf16.xpose.msra.mxu0 0
        %958 = vmatprep.subr.bf16.mxu0 0
        %959 = vmatpush1.bf16.xpose.msra.mxu0 0
        %960 = vmatprep.subr.bf16.mxu0 0
        %961 = vmatpush1.bf16.xpose.msra.mxu0 0
        %962 = vmatprep.subr.bf16.mxu0 0
        %963 = vmatpush1.bf16.xpose.msra.mxu0 0
        %964 = vmatprep.subr.bf16.mxu0 0
        %965 = vmatpush1.bf16.xpose.msra.mxu0 0
        %966 = vmatprep.subr.bf16.mxu0 0
        %967 = vmatpush1.bf16.xpose.msra.mxu0 0
        %968 = vmatprep.subr.bf16.mxu0 0
        %969 = vmatpush1.bf16.xpose.msra.mxu0 0
        %970 = vmatprep.subr.bf16.mxu0 0
        %971 = vmatpush1.bf16.xpose.msra.mxu0 0
        %972 = vmatprep.subr.bf16.mxu0 0
        %973 = vmatpush1.bf16.xpose.msra.mxu0 0
        %974 = vmatprep.subr.bf16.mxu0 0
        %975 = vmatpush1.bf16.xpose.msra.mxu0 0
        %976 = vmatprep.mubr.bf16.mxu0 0
        %977 = vmatmul.mubr.bf16.gmra.mrb[0].mxu0 %v939
        %v978 = vpop.f32.mrb[0].mxu0
        %v979 = vadd.f32 0.0, %v978
        %v980 = vpop.f32.mrb[0].mxu0
        %v981 = vpop.f32.mrb[0].mxu0
        %v982 = vpop.f32.mrb[0].mxu0
        %983 = vdwg.mxu0
        %v984 = vsel %vm646, %v979, -inf
        %985 = vmax.xlane.f32.xlu0 %v984
        %v986 = vpop.xlane.xlu0 %985
        %v987 = vsub.f32 %v979, %v986
        %v988 = vmul.f32 %v987, 1.442695
        %v989 = vpow.pop %v988
        %v990 = vsel %vm646, %v989, 0.0
        %991 = vadd.xlane.f32.xlu0 %v990
        %v992 = vpop.xlane.xlu0 %991
        %v993 = vrcp.pop %v992
        %v994 = vmul.f32 %v989, %v993
        %v995 = vpack.c.bf16 %v994, %v994
        %996 = vrot.lane.b32.xlu0 %v818, 124
        %v997 = vpop.permute.xlu0 %996
        %v999 = vsel %vm646, %v995, 0
        %v1002 = vsel %vm664, %v997, 0
        %1004 = vmatprep.subr.bf16.mxu0 0
        %1005 = vmatpush1.bf16.msra.mxu0 %v1002
        %1006 = vmatprep.subr.bf16.mxu0 0
        %1007 = vmatpush1.bf16.msra.mxu0 0
        %1008 = vmatprep.subr.bf16.mxu0 0
        %1009 = vmatpush1.bf16.msra.mxu0 0
        %1010 = vmatprep.subr.bf16.mxu0 0
        %1011 = vmatpush1.bf16.msra.mxu0 0
        %1012 = vmatprep.subr.bf16.mxu0 0
        %1013 = vmatpush1.bf16.msra.mxu0 0
        %1014 = vmatprep.subr.bf16.mxu0 0
        %1015 = vmatpush1.bf16.msra.mxu0 0
        %1016 = vmatprep.subr.bf16.mxu0 0
        %1017 = vmatpush1.bf16.msra.mxu0 0
        %1018 = vmatprep.subr.bf16.mxu0 0
        %1019 = vmatpush1.bf16.msra.mxu0 0
        %1020 = vmatprep.subr.bf16.mxu0 0
        %1021 = vmatpush1.bf16.msra.mxu0 0
        %1022 = vmatprep.subr.bf16.mxu0 0
        %1023 = vmatpush1.bf16.msra.mxu0 0
        %1024 = vmatprep.subr.bf16.mxu0 0
        %1025 = vmatpush1.bf16.msra.mxu0 0
        %1026 = vmatprep.subr.bf16.mxu0 0
        %1027 = vmatpush1.bf16.msra.mxu0 0
        %1028 = vmatprep.subr.bf16.mxu0 0
        %1029 = vmatpush1.bf16.msra.mxu0 0
        %1030 = vmatprep.subr.bf16.mxu0 0
        %1031 = vmatpush1.bf16.msra.mxu0 0
        %1032 = vmatprep.subr.bf16.mxu0 0
        %1033 = vmatpush1.bf16.msra.mxu0 0
        %1034 = vmatprep.subr.bf16.mxu0 0
        %1035 = vmatpush1.bf16.msra.mxu0 0
        %1036 = vmatprep.mubr.bf16.mxu0 0
        %1037 = vmatmul.mubr.bf16.gmra.mrb[0].mxu0 %v999
        %v1038 = vpop.f32.mrb[0].mxu0
        %v1039 = vadd.f32 0.0, %v1038
        %v1040 = vpop.f32.mrb[0].mxu0
        %v1041 = vpop.f32.mrb[0].mxu0
        %v1042 = vpop.f32.mrb[0].mxu0
        %1043 = vdwg.mxu0
        %1045 = vrot.lane.b32.xlu0 %v813, 12
        %v1046 = vpop.permute.xlu0 %1045
        %1049 = vrot.lane.b32.xlu0 %v929, 24
        %v1050 = vpop.permute.xlu0 %1049
        %1053 = vrot.lane.b32.xlu0 %v1039, 36
        %v1054 = vpop.permute.xlu0 %1053
        %v1056 = vsel %vm599, %v703, %v1046
        %vm1057 = vcmask 195584
        %v1058 = vsel %vm1057, %v1056, %v1050
        %vm1059 = vcmask 293888
        %v1060 = vsel %vm1059, %v1058, %v1054
        %v1061 = vpack.c.bf16 %v1060, %v1060
        %v1062 = vld [vmem:[%s5] sm:$0xf]
        %v1063 = vld [vmem:[%s5 + $0x4] sm:$0xf]
        %v1064 = vld [vmem:[%s5 + $0x8] sm:$0xf]
        %v1065 = vld [vmem:[%s5 + $0xc] sm:$0xf]
        %v1066 = vld [vmem:[%s5 + $0x10] sm:$0xf]
        %v1067 = vld [vmem:[%s5 + $0x14] sm:$0xf]
        %v1068 = vld [vmem:[%s6] sm:$0x1]
        %v1070 = vlaneseq
        %v1071 = vshrl.u32 %v1070, 7
        %v1072 = vsub.s32 0, %v1071
        %v1073 = vrot.slane %v1068, %v1072
        %v1081 = vunpack.c.l.b16 %v1062
        %v1082 = vunpack.c.l.b16 %v1063
        %v1083 = vunpack.c.l.b16 %v1064
        %v1084 = vunpack.c.l.b16 %v1065
        %v1085 = vunpack.c.l.b16 %v1066
        %v1086 = vunpack.c.l.b16 %v1067
        %v1087 = vpack.c.b16 %v1082, %v1081
        %v1088 = vpack.c.b16 %v1084, %v1083
        %v1089 = vpack.c.b16 %v1086, %v1085
        %v1094 = vsel %vm473, %v1061, 0
        %1096 = vmatprep.subr.bf16.mxu0 0
        %1097 = vmatpush1.bf16.msra.mxu0 %v1087
        %1098 = vmatprep.subr.bf16.mxu0 0
        %1099 = vmatpush1.bf16.msra.mxu0 %v1088
        %1100 = vmatprep.subr.bf16.mxu0 0
        %1101 = vmatpush1.bf16.msra.mxu0 %v1089
        %1102 = vmatprep.subr.bf16.mxu0 0
        %1103 = vmatpush1.bf16.msra.mxu0 0
        %1104 = vmatprep.subr.bf16.mxu0 0
        %1105 = vmatpush1.bf16.msra.mxu0 0
        %1106 = vmatprep.subr.bf16.mxu0 0
        %1107 = vmatpush1.bf16.msra.mxu0 0
        %1108 = vmatprep.subr.bf16.mxu0 0
        %1109 = vmatpush1.bf16.msra.mxu0 0
        %1110 = vmatprep.subr.bf16.mxu0 0
        %1111 = vmatpush1.bf16.msra.mxu0 0
        %1112 = vmatprep.subr.bf16.mxu0 0
        %1113 = vmatpush1.bf16.msra.mxu0 0
        %1114 = vmatprep.subr.bf16.mxu0 0
        %1115 = vmatpush1.bf16.msra.mxu0 0
        %1116 = vmatprep.subr.bf16.mxu0 0
        %1117 = vmatpush1.bf16.msra.mxu0 0
        %1118 = vmatprep.subr.bf16.mxu0 0
        %1119 = vmatpush1.bf16.msra.mxu0 0
        %1120 = vmatprep.subr.bf16.mxu0 0
        %1121 = vmatpush1.bf16.msra.mxu0 0
        %1122 = vmatprep.subr.bf16.mxu0 0
        %1123 = vmatpush1.bf16.msra.mxu0 0
        %1124 = vmatprep.subr.bf16.mxu0 0
        %1125 = vmatpush1.bf16.msra.mxu0 0
        %1126 = vmatprep.subr.bf16.mxu0 0
        %1127 = vmatpush1.bf16.msra.mxu0 0
        %1128 = vmatprep.mubr.bf16.mxu0 0
        %1129 = vmatmul.mubr.bf16.gmra.mrb[0].mxu0 %v1094
        %v1130 = vpop.f32.mrb[0].mxu0
        %v1131 = vadd.f32 %v1073, %v1130
        %v1132 = vpop.f32.mrb[0].mxu0
        %v1133 = vpop.f32.mrb[0].mxu0
        %v1134 = vpop.f32.mrb[0].mxu0
        %1135 = vdwg.mxu0
        %v1136 = vadd.f32 %v470, %v1131
        %v1137 = vld [vmem:[%s7] sm:$0x1]
        %v1138 = vld [vmem:[%s8] sm:$0x1]
        %v1139 = vsel %vm473, %v1136, 0.0
        %1140 = vadd.xlane.f32.xlu0 %v1139
        %v1141 = vpop.xlane.xlu0 %1140
        %v1142 = vmul.f32 %v1141, %v477
        %v1143 = vsub.f32 %v1136, %v1142
        %v1144 = vmul.f32 %v1143, %v1143
        %v1145 = vsel %vm473, %v1144, 0.0
        %1146 = vadd.xlane.f32.xlu0 %v1145
        %v1147 = vpop.xlane.xlu0 %1146
        %v1148 = vmul.f32 %v1147, %v477
        %v1149 = vadd.f32 %v1148, 1e-05
        %v1150 = vrsqrt.pop %v1149
        %v1151 = vmul.f32 %v1143, %v1150
        %v1153 = vlaneseq
        %v1154 = vshrl.u32 %v1153, 7
        %v1155 = vsub.s32 0, %v1154
        %v1156 = vrot.slane %v1137, %v1155
        %v1158 = vmul.f32 %v1151, %v1156
        %v1160 = vlaneseq
        %v1161 = vshrl.u32 %v1160, 7
        %v1162 = vsub.s32 0, %v1161
        %v1163 = vrot.slane %v1138, %v1162
        %v1165 = vadd.f32 %v1158, %v1163
        %v1166 = vpack.c.bf16 %v1165, %v1165
        %v1167 = vld [vmem:[%s9] sm:$0xf]
        %v1168 = vld [vmem:[%s9 + $0x4] sm:$0xf]
        %v1169 = vld [vmem:[%s9 + $0x8] sm:$0xf]
        %v1170 = vld [vmem:[%s9 + $0xc] sm:$0xf]
        %v1171 = vld [vmem:[%s9 + $0x10] sm:$0xf]
        %v1172 = vld [vmem:[%s9 + $0x14] sm:$0xf]
        %v1173 = vld [vmem:[%s10] sm:$0x1]
        %v1175 = vlaneseq
        %v1176 = vshrl.u32 %v1175, 7
        %v1177 = vsub.s32 0, %v1176
        %v1178 = vrot.slane %v1173, %v1177
        %v1186 = vunpack.c.l.b16 %v1167
        %v1187 = vunpack.c.l.b16 %v1168
        %v1188 = vunpack.c.l.b16 %v1169
        %v1189 = vunpack.c.l.b16 %v1170
        %v1190 = vunpack.c.l.b16 %v1171
        %v1191 = vunpack.c.l.b16 %v1172
        %v1192 = vpack.c.b16 %v1187, %v1186
        %v1193 = vpack.c.b16 %v1189, %v1188
        %v1194 = vpack.c.b16 %v1191, %v1190
        %v1199 = vsel %vm473, %v1166, 0
        %1201 = vmatprep.subr.bf16.mxu0 0
        %1202 = vmatpush1.bf16.msra.mxu0 %v1192
        %1203 = vmatprep.subr.bf16.mxu0 0
        %1204 = vmatpush1.bf16.msra.mxu0 %v1193
        %1205 = vmatprep.subr.bf16.mxu0 0
        %1206 = vmatpush1.bf16.msra.mxu0 %v1194
        %1207 = vmatprep.subr.bf16.mxu0 0
        %1208 = vmatpush1.bf16.msra.mxu0 0
        %1209 = vmatprep.subr.bf16.mxu0 0
        %1210 = vmatpush1.bf16.msra.mxu0 0
        %1211 = vmatprep.subr.bf16.mxu0 0
        %1212 = vmatpush1.bf16.msra.mxu0 0
        %1213 = vmatprep.subr.bf16.mxu0 0
        %1214 = vmatpush1.bf16.msra.mxu0 0
        %1215 = vmatprep.subr.bf16.mxu0 0
        %1216 = vmatpush1.bf16.msra.mxu0 0
        %1217 = vmatprep.subr.bf16.mxu0 0
        %1218 = vmatpush1.bf16.msra.mxu0 0
        %1219 = vmatprep.subr.bf16.mxu0 0
        %1220 = vmatpush1.bf16.msra.mxu0 0
        %1221 = vmatprep.subr.bf16.mxu0 0
        %1222 = vmatpush1.bf16.msra.mxu0 0
        %1223 = vmatprep.subr.bf16.mxu0 0
        %1224 = vmatpush1.bf16.msra.mxu0 0
        %1225 = vmatprep.subr.bf16.mxu0 0
        %1226 = vmatpush1.bf16.msra.mxu0 0
        %1227 = vmatprep.subr.bf16.mxu0 0
        %1228 = vmatpush1.bf16.msra.mxu0 0
        %1229 = vmatprep.subr.bf16.mxu0 0
        %1230 = vmatpush1.bf16.msra.mxu0 0
        %1231 = vmatprep.subr.bf16.mxu0 0
        %1232 = vmatpush1.bf16.msra.mxu0 0
        %1233 = vmatprep.mubr.bf16.mxu0 0
        %1234 = vmatmul.mubr.bf16.gmra.mrb[0].mxu0 %v1199
        %v1235 = vpop.f32.mrb[0].mxu0
        %v1236 = vadd.f32 %v1178, %v1235
        %v1237 = vpop.f32.mrb[0].mxu0
        %v1238 = vpop.f32.mrb[0].mxu0
        %v1239 = vpop.f32.mrb[0].mxu0
        %1240 = vdwg.mxu0
        %v1241 = vmul.f32 %v1236, 0.5
        %v1242 = vmul.f32 %v1236, 0.70710677
        %vm1243 = vcmp.ge.f32.partialorder %v1242, 0.0
        %v1244 = vsel %vm1243, 1.0, -1.0
        %v1245 = vand.u32 2147483647, %v1242
        %v1246 = vmul.f32 %v1245, 0.3275911
        %v1247 = vadd.f32 %v1246, 1.0
        %v1248 = vrcp.pop %v1247
        %v1249 = vmul.f32 1.0, %v1248
        %v1250 = vmul.f32 %v1249, 1.0614054
        %v1251 = vadd.f32 %v1250, -1.4531521
        %v1252 = vmul.f32 %v1251, %v1249
        %v1253 = vadd.f32 %v1252, 1.4214138
        %v1254 = vmul.f32 %v1253, %v1249
        %v1255 = vadd.f32 %v1254, -0.28449672
        %v1256 = vmul.f32 %v1255, %v1249
        %v1257 = vadd.f32 %v1256, 0.2548296
        %v1258 = vmul.f32 %v1257, %v1249
        %v1259 = vsub.f32 0.0, %v1245
        %v1260 = vmul.f32 %v1259, %v1245
        %v1261 = vmul.f32 %v1260, 1.442695
        %v1262 = vpow.pop %v1261
        %v1263 = vmul.f32 %v1258, %v1262
        %v1264 = vsub.f32 1.0, %v1263
        %v1265 = vmul.f32 %v1244, %v1264
        %v1266 = vadd.f32 %v1265, 1.0
        %v1267 = vmul.f32 %v1241, %v1266
        %v1268 = vpack.c.bf16 %v1267, %v1267
        %v1269 = vld [vmem:[%s11] sm:$0xf]
        %v1270 = vld [vmem:[%s11 + $0x4] sm:$0xf]
        %v1271 = vld [vmem:[%s11 + $0x8] sm:$0xf]
        %v1272 = vld [vmem:[%s11 + $0xc] sm:$0xf]
        %v1273 = vld [vmem:[%s11 + $0x10] sm:$0xf]
        %v1274 = vld [vmem:[%s11 + $0x14] sm:$0xf]
        %v1275 = vld [vmem:[%s11 + $0x18] sm:$0xf]
        %v1276 = vld [vmem:[%s11 + $0x1c] sm:$0xf]
        %v1277 = vld [vmem:[%s11 + $0x20] sm:$0xf]
        %v1278 = vld [vmem:[%s11 + $0x24] sm:$0xf]
        %v1279 = vld [vmem:[%s11 + $0x28] sm:$0xf]
        %v1280 = vld [vmem:[%s11 + $0x2c] sm:$0xf]
        %v1281 = vld [vmem:[%s11 + $0x30] sm:$0xf]
        %v1282 = vld [vmem:[%s11 + $0x34] sm:$0xf]
        %v1283 = vld [vmem:[%s11 + $0x38] sm:$0xf]
        %v1284 = vld [vmem:[%s11 + $0x3c] sm:$0xf]
        %v1285 = vld [vmem:[%s12] sm:$0x1]
        %v1287 = vlaneseq
        %v1288 = vshrl.u32 %v1287, 7
        %v1289 = vsub.s32 0, %v1288
        %v1290 = vrot.slane %v1285, %v1289
        %v1308 = vunpack.c.l.b16 %v1269
        %v1309 = vunpack.c.l.b16 %v1270
        %v1310 = vunpack.c.l.b16 %v1271
        %v1311 = vunpack.c.l.b16 %v1272
        %v1312 = vunpack.c.l.b16 %v1273
        %v1313 = vunpack.c.l.b16 %v1274
        %v1314 = vunpack.c.l.b16 %v1275
        %v1315 = vunpack.c.l.b16 %v1276
        %v1316 = vunpack.c.l.b16 %v1277
        %v1317 = vunpack.c.l.b16 %v1278
        %v1318 = vunpack.c.l.b16 %v1279
        %v1319 = vunpack.c.l.b16 %v1280
        %v1320 = vunpack.c.l.b16 %v1281
        %v1321 = vunpack.c.l.b16 %v1282
        %v1322 = vunpack.c.l.b16 %v1283
        %v1323 = vunpack.c.l.b16 %v1284
        %v1324 = vpack.c.b16 %v1309, %v1308
        %v1325 = vpack.c.b16 %v1311, %v1310
        %v1326 = vpack.c.b16 %v1313, %v1312
        %v1327 = vpack.c.b16 %v1315, %v1314
        %v1328 = vpack.c.b16 %v1317, %v1316
        %v1329 = vpack.c.b16 %v1319, %v1318
        %v1330 = vpack.c.b16 %v1321, %v1320
        %v1331 = vpack.c.b16 %v1323, %v1322
        %1340 = vmatprep.subr.bf16.mxu0 0
        %1341 = vmatpush1.bf16.msra.mxu0 %v1324
        %1342 = vmatprep.subr.bf16.mxu0 0
        %1343 = vmatpush1.bf16.msra.mxu0 %v1325
        %1344 = vmatprep.subr.bf16.mxu0 0
        %1345 = vmatpush1.bf16.msra.mxu0 %v1326
        %1346 = vmatprep.subr.bf16.mxu0 0
        %1347 = vmatpush1.bf16.msra.mxu0 %v1327
        %1348 = vmatprep.subr.bf16.mxu0 0
        %1349 = vmatpush1.bf16.msra.mxu0 %v1328
        %1350 = vmatprep.subr.bf16.mxu0 0
        %1351 = vmatpush1.bf16.msra.mxu0 %v1329
        %1352 = vmatprep.subr.bf16.mxu0 0
        %1353 = vmatpush1.bf16.msra.mxu0 %v1330
        %1354 = vmatprep.subr.bf16.mxu0 0
        %1355 = vmatpush1.bf16.msra.mxu0 %v1331
        %1356 = vmatprep.subr.bf16.mxu0 0
        %1357 = vmatpush1.bf16.msra.mxu0 0
        %1358 = vmatprep.subr.bf16.mxu0 0
        %1359 = vmatpush1.bf16.msra.mxu0 0
        %1360 = vmatprep.subr.bf16.mxu0 0
        %1361 = vmatpush1.bf16.msra.mxu0 0
        %1362 = vmatprep.subr.bf16.mxu0 0
        %1363 = vmatpush1.bf16.msra.mxu0 0
        %1364 = vmatprep.subr.bf16.mxu0 0
        %1365 = vmatpush1.bf16.msra.mxu0 0
        %1366 = vmatprep.subr.bf16.mxu0 0
        %1367 = vmatpush1.bf16.msra.mxu0 0
        %1368 = vmatprep.subr.bf16.mxu0 0
        %1369 = vmatpush1.bf16.msra.mxu0 0
        %1370 = vmatprep.subr.bf16.mxu0 0
        %1371 = vmatpush1.bf16.msra.mxu0 0
        %1372 = vmatprep.mubr.bf16.mxu0 0
        %1373 = vmatmul.mubr.bf16.gmra.mrb[0].mxu0 %v1268
        %v1374 = vpop.f32.mrb[0].mxu0
        %v1375 = vadd.f32 %v1290, %v1374
        %v1376 = vpop.f32.mrb[0].mxu0
        %v1377 = vpop.f32.mrb[0].mxu0
        %v1378 = vpop.f32.mrb[0].mxu0
        %1379 = vdwg.mxu0
        %v1380 = vadd.f32 %v1136, %v1375
        %1381 = vst.msk [vmem:[%s468] sm:$0xff] %vm473, %v1380
        %s1382 = sand.u32 %s317, 1
        %s1383 = scalar_lea.sflag [#allocation4], %s1382
        %s1384 = sand.u32 %s317, 1
        %s1385 = smul.addr %s1384, 8
        %s1386 = scalar_lea.vmem [#allocation7], %s1385
        // Predicated region
        $region81: #{tpu_custom_call.1} parent=71 // pred_check
          %p1387 = pneg %p327
        $region82: #{tpu_custom_call.1} parent=71 // pred_check_branch
          %1389 = sbr.rel (%p1387) target = $region84
        $region83: #{tpu_custom_call.1} parent=71 // pred_region
          %s1391 = ssub.s32 128, 128
          %1392 = vsyncadd %s1383, %s1391
          %s1393 = smul.addr %s31, 128
          %s1394 = scalar_lea.hbm %s13, %s1393
          %s1396 = sshll.u32 %s1386, 4
          %s1397 = int_to_ptr.vmem [resolvable:$true] %s1396
          %1399 = dma.vmem_to_hbm [thread:$0]  %s1397, 128, %s1394, %s1383
        $region84: #{tpu_custom_call.1} parent=71 // pred_fallthru
          _
      $region72: #{tpu_custom_call.1} parent=5 // pred_fallthru
        _
      %p1400 = scmp.le.s32.totalorder 2, %s26
      // Predicated region
      $region85: #{tpu_custom_call.1} parent=5 // pred_check
        %p1401 = pneg %p1400
      $region86: #{tpu_custom_call.1} parent=5 // pred_check_branch
        %1403 = sbr.rel (%p1401) target = $region88
      $region87: #{tpu_custom_call.1} parent=5 // pred_region
        %s1404 = ssub.s32 %s26, 2
        // Predicated region
        $region89: #{tpu_custom_call.1} parent=87 // pred_check
          %p1405 = pneg %p333
        $region90: #{tpu_custom_call.1} parent=87 // pred_check_branch
          %1407 = sbr.rel (%p1405) target = $region92
        $region91: #{tpu_custom_call.1} parent=87 // pred_region
          %s1408 = sand.u32 %s318, 1
          %s1409 = scalar_lea.sflag [#allocation4], %s1408
          %s1410 = sand.u32 %s318, 1
          %s1411 = smul.addr %s1410, 8
          %s1412 = scalar_lea.vmem [#allocation7], %s1411
          %1413 = dma.done %s1409, 128
        $region92: #{tpu_custom_call.1} parent=87 // pred_fallthru
          _
      $region88: #{tpu_custom_call.1} parent=5 // pred_fallthru
        _
    $region6: #{tpu_custom_call.1} parent=1 // loop_footer
      %s30 = sadd.s32 1, %s26
    $region7: #{tpu_custom_call.1} parent=1 // loop_footer_branch
      %25 = sbr.rel target = $region3
    $region8: #{tpu_custom_call.1} parent=1 // loop_exit
      _
    %1414 = vsyncpa [#allocation3], 1
    %s1415 = scalar_lea.sflag [#allocation3], 1
    %1416 = vsyncpa %s1415, 1
    %1417 = vsyncpa [#allocation6], 1
    %1418 = vsyncpa [#allocation4], 1
    %s1419 = scalar_lea.sflag [#allocation4], 1
    %1420 = vsyncpa %s1419, 1

</llo_original>
